<compile_context>
chip_gen: v7x
topology: tpu7x:2x2x1
jax: 0.10.0
libtpu: 0.0.40
codegen_flags: <defaults>
</compile_context>

<pallas_src>
import jax
import jax.numpy as jnp
from jax import lax
from jax.experimental import pallas as pl
from jax.experimental.pallas import tpu as pltpu


def _round_up(x, m):
    return (x + m - 1) // m * m


def _choose_row_tile(N, row_tile):
    """Pick a row tile tn for the fused head kernel.

    Preference order:
      * tn divides N exactly (avoids a row-padding concatenate copy of x),
      * tn is a multiple of 8 (f32 sublane tiling); multiples of 256 preferred
        for MXU M-dim alignment,
      * grid = N // tn >= 2 and preferably even, so v7x's two TensorCores both
        get work via the "parallel" grid axis.
    Returns (tn, needs_row_pad)."""
    limit = max(8, min(row_tile, N))
    cands = [d for d in range(8, limit + 1, 8) if N % d == 0]
    multi = [d for d in cands if N // d >= 2]
    pool = multi if multi else cands
    if not pool:
        # No multiple-of-8 divisor <= row_tile: fall back to row padding.
        return _round_up(min(row_tile, N), 8), True

    def score(d):
        g = N // d
        return (d % 256 == 0, g % 2 == 0, d)

    return max(pool, key=score), False


# ----------------------------------------------------------------------------
# Kernel: fused head (bbox MLP + reference add + sigmoid, class linear)
# ----------------------------------------------------------------------------
def make_head_kernel(num_hidden):
    """num_hidden = number of (Linear+ReLU) layers before the last bbox layer."""

    def kernel(*refs):
        # refs layout:
        #   [0] x        (TN, D)  f32   (cast to bf16 in-kernel)
        #   [1] ref      (TN, 4)  f32   raw reference points (pre inverse-sigmoid)
        #   [2 + 2i], [3 + 2i]    hidden (w_i bf16, b_i f32) for i < num_hidden
        #   then: wb_pad (H, P) bf16, wc_pad (D, P) bf16, b_fused (1, P) f32,
        #         sel (4, P) f32
        #   [-1] out     (TN, P)  f32   lanes [0:4]=sigmoid boxes, [4:4+C]=logits
        x_ref, ref_ref = refs[0], refs[1]
        out_ref = refs[-1]
        wb_ref, wc_ref, bf_ref, sel_ref = refs[2 + 2 * num_hidden:6 + 2 * num_hidden]

        x32 = x_ref[...]                                   # f32 (TN, D)
        x = x32.astype(jnp.bfloat16)                       # in-kernel cast (free-ish)

        # bbox MLP hidden layers: Linear -> ReLU (f32 accumulate, bf16 activations)
        h = x
        for i in range(num_hidden):
            w = refs[2 + 2 * i][...]                       # bf16
            b = refs[3 + 2 * i][...]                       # f32 (1, H)
            hf = jnp.dot(h, w, preferred_element_type=jnp.float32) + b
            h = jnp.maximum(hf, 0.0).astype(jnp.bfloat16)

        # Fused last stage: box lanes [0:4] from the last bbox layer, class
        # lanes [4:4+C] from the class linear; disjoint zero-padded lanes.
        z = jnp.dot(h, wb_ref[...], preferred_element_type=jnp.float32)
        z = z + jnp.dot(x, wc_ref[...], preferred_element_type=jnp.float32)
        z = z + bf_ref[...]

        # inverse_sigmoid(reference), eps=1e-5 (padded 0.5 cols give exactly 0),
        # placed into the box lanes via a tiny (4, P) selection matmul (f32).
        r = jnp.clip(ref_ref[...], 0.0, 1.0)
        inv = jnp.log(jnp.maximum(r, 1e-5)) - jnp.log(jnp.maximum(1.0 - r, 1e-5))
        z = z + jnp.dot(inv, sel_ref[...], preferred_element_type=jnp.float32)

        # sigmoid only on the box lanes (EUP exp + approx reciprocal); logits raw.
        P = out_ref.shape[-1]
        if P <= 128:
            lane = lax.broadcasted_iota(jnp.int32, z.shape, 1)
            sig = pl.reciprocal(1.0 + jnp.exp(-z), approx=True)
            out_ref[...] = jnp.where(lane < 4, sig, z)
        else:
            # Restrict EUP work to the 128-lane slab holding the 4 box lanes.
            z0 = z[:, :128]
            lane = lax.broadcasted_iota(jnp.int32, z0.shape, 1)
            sig0 = pl.reciprocal(1.0 + jnp.exp(-z0), approx=True)
            out_ref[:, :128] = jnp.where(lane < 4, sig0, z0)
            out_ref[:, 128:] = z[:, 128:]

    return kernel


def run_head(x, references, params, *, row_tile=2048):
    """x: (L, B, Q, D) f32.  references: (L, B, Q, 2 or 4) f32 (raw, in [0,1]).

    Returns (coord (L,B,Q,4) post-sigmoid, logits (L,B,Q,C))."""
    L, B, Q, D = x.shape
    N = L * B * Q

    bbox_params = params['bbox']
    wc, bc = params['class']
    num_layers = len(bbox_params)
    wb_last, bb_last = bbox_params[-1]
    assert wb_last.shape[1] == 4, "bbox head output_dim must be 4 (cxcywh)"
    assert wc.shape[0] == D, "class embed input dim must match hidden dim"
    C = wc.shape[1]
    P = _round_up(4 + C, 128)                              # lane-dense fused width

    # References: flatten, pad 2-dim refs with 0.5 (inverse_sigmoid(0.5) == 0).
    rd = references.shape[-1]
    ref_flat = references.reshape(N, rd).astype(jnp.float32)
    if rd == 2:
        ref_flat = jnp.concatenate(
            [ref_flat, jnp.full((N, 2), 0.5, jnp.float32)], axis=-1)
    else:
        assert rd == 4

    # Row tile: divisor of N whenever possible (no padding copy).
    tn, needs_pad = _choose_row_tile(N, row_tile)
    x_flat = x.reshape(N, D).astype(jnp.float32)           # stays f32; bf16 cast in-kernel
    Np = N
    if needs_pad:
        Np = _round_up(N, tn)
        x_flat = jnp.concatenate(
            [x_flat, jnp.zeros((Np - N, D), x_flat.dtype)], axis=0)
        ref_flat = jnp.concatenate(
            [ref_flat, jnp.full((Np - N, 4), 0.5, jnp.float32)], axis=0)

    # Zero-padded fused weights, fused bias (padded class lanes get a large
    # negative bias so the padded layout never wins a top-k), and the (4, P)
    # selection matrix for the inverse-sigmoid reference add.
    wb_pad = (jnp.zeros((wb_last.shape[0], P), jnp.float32)
              .at[:, :4].set(wb_last).astype(jnp.bfloat16))
    wc_pad = (jnp.zeros((D, P), jnp.float32)
              .at[:, 4:4 + C].set(wc).astype(jnp.bfloat16))
    b_fused = (jnp.full((1, P), -1e4, jnp.float32)
               .at[:, :4].set(bb_last.reshape(1, -1))
               .at[:, 4:4 + C].set(bc.reshape(1, -1)))
    sel = jnp.eye(4, P, dtype=jnp.float32)

    args = [x_flat, ref_flat]
    in_specs = [pl.BlockSpec((tn, D), lambda i: (i, 0)),
                pl.BlockSpec((tn, 4), lambda i: (i, 0))]
    for (w, b) in bbox_params[:-1]:
        wb16 = w.astype(jnp.bfloat16)
        b32 = b.reshape(1, -1).astype(jnp.float32)
        args += [wb16, b32]
        in_specs += [pl.BlockSpec(wb16.shape, lambda i: (0, 0)),
                     pl.BlockSpec(b32.shape, lambda i: (0, 0))]
    args += [wb_pad, wc_pad, b_fused, sel]
    in_specs += [pl.BlockSpec(wb_pad.shape, lambda i: (0, 0)),
                 pl.BlockSpec(wc_pad.shape, lambda i: (0, 0)),
                 pl.BlockSpec(b_fused.shape, lambda i: (0, 0)),
                 pl.BlockSpec(sel.shape, lambda i: (0, 0))]
    # NOTE: the constant-index weight specs could be single-buffered via
    # pipeline_mode=pl.Buffered(1); the total weight footprint is tiny relative
    # to the VMEM budget at these sizes, so the default buffering is kept.

    out_spec = pl.BlockSpec((tn, P), lambda i: (i, 0))
    out_shape = jax.ShapeDtypeStruct((Np, P), jnp.float32)

    # True VMEM footprint: weights (x2 pipeline buffers) + double-buffered
    # x/ref/out tiles + headroom; clamp to [16 MiB, 48 MiB] (<= v7x's 64 MiB).
    bytes_weights = sum(int(a.size) * a.dtype.itemsize for a in args[2:])
    bytes_tiles = tn * (D * 4 + 4 * 4 + P * 4)             # one x + ref + out tile
    vmem_limit = int(min(max(2 * bytes_weights + 2 * bytes_tiles + (4 << 20),
                             16 << 20), 48 << 20))

    fused = pl.pallas_call(
        make_head_kernel(num_layers - 1),
        grid=(Np // tn,),
        in_specs=in_specs,
        out_specs=out_spec,
        out_shape=out_shape,
        compiler_params=pltpu.CompilerParams(
            dimension_semantics=("parallel",),
            vmem_limit_bytes=vmem_limit),
    )(*args)

    if Np != N:
        fused = fused[:N]
    coord = fused[:, :4].reshape(L, B, Q, 4)
    logits = fused[:, 4:4 + C].reshape(L, B, Q, C)
    return coord, logits


# ----------------------------------------------------------------------------
# Inference post-processing (pure XLA): sigmoid is monotone, so top-k runs on
# raw logits; sigmoid / box-convert / scale touch only the k selected entries.
# ----------------------------------------------------------------------------
def run_inference(pred_logits, pred_boxes, target_sizes, *, topk=100):
    B, Q, C = pred_logits.shape
    k = min(topk, Q * C)

    raw, idx = lax.top_k(pred_logits.reshape(B, Q * C), k)   # (B, k)
    scores = jax.nn.sigmoid(raw)
    topk_boxes = idx // C
    labels = idx % C

    boxes_sel = jnp.take_along_axis(pred_boxes, topk_boxes[:, :, None], axis=1)  # (B,k,4)
    cx, cy, w, h = jnp.split(boxes_sel, 4, axis=-1)
    xyxy = jnp.concatenate(
        [cx - 0.5 * w, cy - 0.5 * h, cx + 0.5 * w, cy + 0.5 * h], axis=-1)

    ts = target_sizes.astype(jnp.float32).reshape(B, 2)
    img_h, img_w = ts[:, 0], ts[:, 1]
    scale = jnp.stack([img_w, img_h, img_w, img_h], axis=1)[:, None, :]  # (B,1,4)
    boxes = xyxy * scale
    return [{'scores': scores[b], 'labels': labels[b], 'boxes': boxes[b]}
            for b in range(B)]


# ----------------------------------------------------------------------------
# Parameter init (mirrors nn.Linear default init; weights shared across levels
# exactly like the reference module's ModuleList of one shared module).
# ----------------------------------------------------------------------------
def init_linear(key, fan_in, fan_out):
    kw, kb = jax.random.split(key)
    bound = 1.0 / (fan_in ** 0.5)
    w = jax.random.uniform(kw, (fan_in, fan_out), jnp.float32, -bound, bound)
    b = jax.random.uniform(kb, (1, fan_out), jnp.float32, -bound, bound)
    return w, b


def init_detr_head_params(key, input_dim, hidden_dim, output_dim,
                          num_layers, num_classes):
    dims = [input_dim] + [hidden_dim] * (num_layers - 1) + [output_dim]
    keys = jax.random.split(key, num_layers + 1)
    bbox = [init_linear(keys[i], dims[i], dims[i + 1]) for i in range(num_layers)]
    cls = init_linear(keys[-1], hidden_dim, num_classes)
    return {'bbox': bbox, 'class': cls}


# ----------------------------------------------------------------------------
# Full DeformableDetrHead forward (glue around the Pallas kernel)
# ----------------------------------------------------------------------------
def deformable_detr_head_forward(params, x, init_reference, inter_references,
                                 orig_target_sizes, training=False,
                                 row_tile=2048):
    L = x.shape[0]
    refs = jnp.concatenate(
        [init_reference[None].astype(jnp.float32),
         inter_references[:L - 1].astype(jnp.float32)], axis=0)  # (L, B, Q, rd)

    outputs_coord, outputs_class = run_head(x, refs, params, row_tile=row_tile)

    outputs = {
        'pred_logits': outputs_class[-1],
        'pred_boxes': outputs_coord[-1],
        'aux_outputs': [{'pred_logits': a, 'pred_boxes': b}
                        for a, b in zip(outputs_class[:-1], outputs_coord[:-1])],
    }
    if training:
        return outputs

    results = run_inference(outputs['pred_logits'], outputs['pred_boxes'],
                            orig_target_sizes)
    return results, outputs


# ----------------------------------------------------------------------------
# Pure-JAX reference (same bf16 casting) for a numerical sanity check
# ----------------------------------------------------------------------------
def _reference_forward(params, x, refs):
    L, B, Q, D = x.shape
    N = L * B * Q
    xb = x.reshape(N, D).astype(jnp.bfloat16)
    h = xb
    for (w, b) in params['bbox'][:-1]:
        hf = jnp.dot(h, w.astype(jnp.bfloat16),
                     preferred_element_type=jnp.float32) + b
        h = jnp.maximum(hf, 0.0).astype(jnp.bfloat16)
    wl, bl = params['bbox'][-1]
    tmp = jnp.dot(h, wl.astype(jnp.bfloat16),
                  preferred_element_type=jnp.float32) + bl
    r = jnp.clip(refs.reshape(N, -1).astype(jnp.float32), 0.0, 1.0)
    inv = jnp.log(jnp.maximum(r, 1e-5)) - jnp.log(jnp.maximum(1.0 - r, 1e-5))
    tmp = tmp.at[:, :inv.shape[-1]].add(inv)
    coord = jax.nn.sigmoid(tmp).reshape(L, B, Q, 4)
    wc, bc = params['class']
    logits = (jnp.dot(xb, wc.astype(jnp.bfloat16),
                      preferred_element_type=jnp.float32) + bc).reshape(L, B, Q, -1)
    return coord, logits


# ----------------------------------------------------------------------------
if __name__ == "__main__":
    # Small, Deformable-DETR-consistent shapes.
    L, B, Q = 3, 2, 32                    # decoder layers, batch, queries
    input_dim = hidden_dim = 32
    output_dim = 4                        # cxcywh box
    num_layers = 3                        # bbox MLP depth
    num_classes = 8                       # no background class (focal-loss head)

    key = jax.random.PRNGKey(0)
    k_params, k_x, k_r0, k_ri = jax.random.split(key, 4)
    params = init_detr_head_params(k_params, input_dim, hidden_dim,
                                   output_dim, num_layers, num_classes)

    x = jax.random.normal(k_x, (L, B, Q, input_dim), jnp.float32)
    init_reference = jax.random.uniform(k_r0, (B, Q, 2), jnp.float32, 0.05, 0.95)
    inter_references = jax.random.uniform(k_ri, (L - 1, B, Q, 2), jnp.float32,
                                          0.05, 0.95)
    orig_target_sizes = jnp.array([[480.0, 640.0], [512.0, 512.0]], jnp.float32)

    # Full forward (default row_tile -> tn=96, grid=2 at these toy sizes).
    results, outputs = deformable_detr_head_forward(
        params, x, init_reference, inter_references, orig_target_sizes,
        training=False)
    jax.block_until_ready((results, outputs))

    # Numerical sanity check against a pure-JAX reference (same bf16 casts),
    # at two tilings (default 2-step grid and a 6-step grid).
    refs_stacked = jnp.concatenate([init_reference[None], inter_references], 0)
    coord_r, logits_r = _reference_forward(params, x, refs_stacked)
    for rt in (2048, 32):
        coord_k, logits_k = run_head(x, refs_stacked, params, row_tile=rt)
        assert float(jnp.max(jnp.abs(coord_k - coord_r))) < 1e-2
        assert float(jnp.max(jnp.abs(logits_k - logits_r))) < 2e-2

    # Shape / dtype checks.
    k = min(100, Q * num_classes)
    assert outputs['pred_logits'].shape == (B, Q, num_classes)
    assert outputs['pred_boxes'].shape == (B, Q, output_dim)
    assert len(outputs['aux_outputs']) == L - 1
    assert len(results) == B
    assert results[0]['scores'].shape == (k,)
    assert results[0]['labels'].shape == (k,)
    assert results[0]['labels'].dtype == jnp.int32
    assert results[0]['boxes'].shape == (k, 4)

    print("KERNEL_OK")
</pallas_src>

<mosaic_0001>
module attributes {stable_mosaic.version = 11 : i64} {
  func.func @kernel(%arg0: i32, %arg1: memref<96x32xf32, #tpu.memory_space<vmem>>, %arg2: memref<96x4xf32, #tpu.memory_space<vmem>>, %arg3: memref<32x32xbf16, #tpu.memory_space<vmem>>, %arg4: memref<1x32xf32, #tpu.memory_space<vmem>>, %arg5: memref<32x32xbf16, #tpu.memory_space<vmem>>, %arg6: memref<1x32xf32, #tpu.memory_space<vmem>>, %arg7: memref<32x128xbf16, #tpu.memory_space<vmem>>, %arg8: memref<32x128xbf16, #tpu.memory_space<vmem>>, %arg9: memref<1x128xf32, #tpu.memory_space<vmem>>, %arg10: memref<4x128xf32, #tpu.memory_space<vmem>>, %arg11: memref<96x128xf32, #tpu.memory_space<vmem>>) attributes {dimension_semantics = [#tpu.dimension_semantics<parallel>], iteration_bounds = array<i64: 2>, scalar_prefetch = 0 : i64, scratch_operands = 0 : i64, tpu.core_type = #tpu.core_type<tc>, window_params = [{transform_indices = @transform_0, window_bounds = array<i64: 96, 32>}, {transform_indices = @transform_1, window_bounds = array<i64: 96, 4>}, {pipeline_mode = #tpu.pipeline_mode<synchronous>, transform_indices = @transform_2, window_bounds = array<i64: 32, 32>}, {pipeline_mode = #tpu.pipeline_mode<synchronous>, transform_indices = @transform_3, window_bounds = array<i64: 1, 32>}, {pipeline_mode = #tpu.pipeline_mode<synchronous>, transform_indices = @transform_4, window_bounds = array<i64: 32, 32>}, {pipeline_mode = #tpu.pipeline_mode<synchronous>, transform_indices = @transform_5, window_bounds = array<i64: 1, 32>}, {pipeline_mode = #tpu.pipeline_mode<synchronous>, transform_indices = @transform_6, window_bounds = array<i64: 32, 128>}, {pipeline_mode = #tpu.pipeline_mode<synchronous>, transform_indices = @transform_7, window_bounds = array<i64: 32, 128>}, {pipeline_mode = #tpu.pipeline_mode<synchronous>, transform_indices = @transform_8, window_bounds = array<i64: 1, 128>}, {pipeline_mode = #tpu.pipeline_mode<synchronous>, transform_indices = @transform_9, window_bounds = array<i64: 4, 128>}, {transform_indices = @transform_10, window_bounds = array<i64: 96, 128>}]} {
    %c0 = arith.constant 0 : index
    %c0_0 = arith.constant 0 : index
    %0 = vector.load %arg1[%c0, %c0_0] : memref<96x32xf32, #tpu.memory_space<vmem>>, vector<96x32xf32>
    %1 = arith.truncf %0 : vector<96x32xf32> to vector<96x32xbf16>
    %c0_1 = arith.constant 0 : index
    %c0_2 = arith.constant 0 : index
    %2 = vector.load %arg3[%c0_1, %c0_2] : memref<32x32xbf16, #tpu.memory_space<vmem>>, vector<32x32xbf16>
    %c0_3 = arith.constant 0 : index
    %c0_4 = arith.constant 0 : index
    %3 = vector.load %arg4[%c0_3, %c0_4] : memref<1x32xf32, #tpu.memory_space<vmem>>, vector<1x32xf32>
    %cst = arith.constant dense<0.000000e+00> : vector<96x32xf32>
    %4 = tpu.matmul %1, %2, %cst {dimension_numbers = #tpu.dot_dimension_numbers<[1], [0], [0], [1], [0, 0, 1, 1], [], []>} : vector<96x32xbf16>, vector<32x32xbf16>, vector<96x32xf32> -> vector<96x32xf32>
    %5 = vector.broadcast %3 : vector<1x32xf32> to vector<96x32xf32>
    %6 = arith.addf %4, %5 : vector<96x32xf32>
    %cst_5 = arith.constant 0.000000e+00 : f32
    %7 = vector.broadcast %cst_5 : f32 to vector<96x32xf32>
    %8 = arith.maximumf %6, %7 : vector<96x32xf32>
    %9 = arith.truncf %8 : vector<96x32xf32> to vector<96x32xbf16>
    %c0_6 = arith.constant 0 : index
    %c0_7 = arith.constant 0 : index
    %10 = vector.load %arg5[%c0_6, %c0_7] : memref<32x32xbf16, #tpu.memory_space<vmem>>, vector<32x32xbf16>
    %c0_8 = arith.constant 0 : index
    %c0_9 = arith.constant 0 : index
    %11 = vector.load %arg6[%c0_8, %c0_9] : memref<1x32xf32, #tpu.memory_space<vmem>>, vector<1x32xf32>
    %cst_10 = arith.constant dense<0.000000e+00> : vector<96x32xf32>
    %12 = tpu.matmul %9, %10, %cst_10 {dimension_numbers = #tpu.dot_dimension_numbers<[1], [0], [0], [1], [0, 0, 1, 1], [], []>} : vector<96x32xbf16>, vector<32x32xbf16>, vector<96x32xf32> -> vector<96x32xf32>
    %13 = vector.broadcast %11 : vector<1x32xf32> to vector<96x32xf32>
    %14 = arith.addf %12, %13 : vector<96x32xf32>
    %cst_11 = arith.constant 0.000000e+00 : f32
    %15 = vector.broadcast %cst_11 : f32 to vector<96x32xf32>
    %16 = arith.maximumf %14, %15 : vector<96x32xf32>
    %17 = arith.truncf %16 : vector<96x32xf32> to vector<96x32xbf16>
    %c0_12 = arith.constant 0 : index
    %c0_13 = arith.constant 0 : index
    %18 = vector.load %arg7[%c0_12, %c0_13] : memref<32x128xbf16, #tpu.memory_space<vmem>>, vector<32x128xbf16>
    %cst_14 = arith.constant dense<0.000000e+00> : vector<96x128xf32>
    %19 = tpu.matmul %17, %18, %cst_14 {dimension_numbers = #tpu.dot_dimension_numbers<[1], [0], [0], [1], [0, 0, 1, 1], [], []>} : vector<96x32xbf16>, vector<32x128xbf16>, vector<96x128xf32> -> vector<96x128xf32>
    %c0_15 = arith.constant 0 : index
    %c0_16 = arith.constant 0 : index
    %20 = vector.load %arg8[%c0_15, %c0_16] : memref<32x128xbf16, #tpu.memory_space<vmem>>, vector<32x128xbf16>
    %cst_17 = arith.constant dense<0.000000e+00> : vector<96x128xf32>
    %21 = tpu.matmul %1, %20, %cst_17 {dimension_numbers = #tpu.dot_dimension_numbers<[1], [0], [0], [1], [0, 0, 1, 1], [], []>} : vector<96x32xbf16>, vector<32x128xbf16>, vector<96x128xf32> -> vector<96x128xf32>
    %22 = arith.addf %19, %21 : vector<96x128xf32>
    %c0_18 = arith.constant 0 : index
    %c0_19 = arith.constant 0 : index
    %23 = vector.load %arg9[%c0_18, %c0_19] : memref<1x128xf32, #tpu.memory_space<vmem>>, vector<1x128xf32>
    %24 = vector.broadcast %23 : vector<1x128xf32> to vector<96x128xf32>
    %25 = arith.addf %22, %24 : vector<96x128xf32>
    %c0_20 = arith.constant 0 : index
    %c0_21 = arith.constant 0 : index
    %26 = vector.load %arg2[%c0_20, %c0_21] : memref<96x4xf32, #tpu.memory_space<vmem>>, vector<96x4xf32>
    %cst_22 = arith.constant 0.000000e+00 : f32
    %cst_23 = arith.constant 1.000000e+00 : f32
    %27 = vector.broadcast %cst_22 : f32 to vector<96x4xf32>
    %28 = arith.maximumf %27, %26 : vector<96x4xf32>
    %29 = vector.broadcast %cst_23 : f32 to vector<96x4xf32>
    %30 = arith.minimumf %29, %28 : vector<96x4xf32>
    %cst_24 = arith.constant 9.99999974E-6 : f32
    %31 = vector.broadcast %cst_24 : f32 to vector<96x4xf32>
    %32 = arith.maximumf %30, %31 : vector<96x4xf32>
    %33 = math.log %32 : vector<96x4xf32>
    %cst_25 = arith.constant 1.000000e+00 : f32
    %34 = vector.broadcast %cst_25 : f32 to vector<96x4xf32>
    %35 = arith.subf %34, %30 : vector<96x4xf32>
    %cst_26 = arith.constant 9.99999974E-6 : f32
    %36 = vector.broadcast %cst_26 : f32 to vector<96x4xf32>
    %37 = arith.maximumf %35, %36 : vector<96x4xf32>
    %38 = math.log %37 : vector<96x4xf32>
    %39 = arith.subf %33, %38 : vector<96x4xf32>
    %c0_27 = arith.constant 0 : index
    %c0_28 = arith.constant 0 : index
    %40 = vector.load %arg10[%c0_27, %c0_28] : memref<4x128xf32, #tpu.memory_space<vmem>>, vector<4x128xf32>
    %cst_29 = arith.constant dense<0.000000e+00> : vector<96x128xf32>
    %41 = tpu.matmul %39, %40, %cst_29 {dimension_numbers = #tpu.dot_dimension_numbers<[1], [0], [0], [1], [0, 0, 1, 1], [], []>} : vector<96x4xf32>, vector<4x128xf32>, vector<96x128xf32> -> vector<96x128xf32>
    %42 = arith.addf %25, %41 : vector<96x128xf32>
    %43 = tpu.iota {dimensions = array<i32: 1>} : vector<96x128xi32>
    %cst_30 = arith.constant 0.000000e+00 : f32
    %44 = vector.broadcast %cst_30 : f32 to vector<96x128xf32>
    %45 = arith.subf %44, %42 : vector<96x128xf32>
    %46 = math.exp %45 : vector<96x128xf32>
    %cst_31 = arith.constant 1.000000e+00 : f32
    %47 = vector.broadcast %cst_31 : f32 to vector<96x128xf32>
    %48 = arith.addf %47, %46 : vector<96x128xf32>
    %49 = tpu.reciprocal %48 {approx = true} : vector<96x128xf32> -> vector<96x128xf32>
    %c4_i32 = arith.constant 4 : i32
    %50 = vector.broadcast %c4_i32 : i32 to vector<96x128xi32>
    %51 = arith.cmpi slt, %43, %50 : vector<96x128xi32>
    %52 = arith.select %51, %49, %42 : vector<96x128xi1>, vector<96x128xf32>
    %c0_32 = arith.constant 0 : index
    %c0_33 = arith.constant 0 : index
    %53 = vector.load %arg11[%c0_32, %c0_33] : memref<96x128xf32, #tpu.memory_space<vmem>>, vector<96x128xf32>
    tpu.vector_store %arg11[%c0_32, %c0_33], %52 {strides = array<i32>} : memref<96x128xf32, #tpu.memory_space<vmem>>, vector<96x128xf32>,
    return
  }
  func.func @transform_0(%arg0: i32) -> (i32, i32) {
    %c0_i32 = arith.constant 0 : i32
    %c0_i32_0 = arith.constant 0 : i32
    return %arg0, %c0_i32 : i32, i32
  }
  func.func @transform_1(%arg0: i32) -> (i32, i32) {
    %c0_i32 = arith.constant 0 : i32
    %c0_i32_0 = arith.constant 0 : i32
    return %arg0, %c0_i32 : i32, i32
  }
  func.func @transform_2(%arg0: i32) -> (i32, i32) {
    %c0_i32 = arith.constant 0 : i32
    %c0_i32_0 = arith.constant 0 : i32
    %c0_i32_1 = arith.constant 0 : i32
    return %c0_i32, %c0_i32_0 : i32, i32
  }
  func.func @transform_3(%arg0: i32) -> (i32, i32) {
    %c0_i32 = arith.constant 0 : i32
    %c0_i32_0 = arith.constant 0 : i32
    %c0_i32_1 = arith.constant 0 : i32
    return %c0_i32, %c0_i32_0 : i32, i32
  }
  func.func @transform_4(%arg0: i32) -> (i32, i32) {
    %c0_i32 = arith.constant 0 : i32
    %c0_i32_0 = arith.constant 0 : i32
    %c0_i32_1 = arith.constant 0 : i32
    return %c0_i32, %c0_i32_0 : i32, i32
  }
  func.func @transform_5(%arg0: i32) -> (i32, i32) {
    %c0_i32 = arith.constant 0 : i32
    %c0_i32_0 = arith.constant 0 : i32
    %c0_i32_1 = arith.constant 0 : i32
    return %c0_i32, %c0_i32_0 : i32, i32
  }
  func.func @transform_6(%arg0: i32) -> (i32, i32) {
    %c0_i32 = arith.constant 0 : i32
    %c0_i32_0 = arith.constant 0 : i32
    %c0_i32_1 = arith.constant 0 : i32
    return %c0_i32, %c0_i32_0 : i32, i32
  }
  func.func @transform_7(%arg0: i32) -> (i32, i32) {
    %c0_i32 = arith.constant 0 : i32
    %c0_i32_0 = arith.constant 0 : i32
    %c0_i32_1 = arith.constant 0 : i32
    return %c0_i32, %c0_i32_0 : i32, i32
  }
  func.func @transform_8(%arg0: i32) -> (i32, i32) {
    %c0_i32 = arith.constant 0 : i32
    %c0_i32_0 = arith.constant 0 : i32
    %c0_i32_1 = arith.constant 0 : i32
    return %c0_i32, %c0_i32_0 : i32, i32
  }
  func.func @transform_9(%arg0: i32) -> (i32, i32) {
    %c0_i32 = arith.constant 0 : i32
    %c0_i32_0 = arith.constant 0 : i32
    %c0_i32_1 = arith.constant 0 : i32
    return %c0_i32, %c0_i32_0 : i32, i32
  }
  func.func @transform_10(%arg0: i32) -> (i32, i32) {
    %c0_i32 = arith.constant 0 : i32
    %c0_i32_0 = arith.constant 0 : i32
    return %arg0, %c0_i32 : i32, i32
  }
}

</mosaic_0001>

<llo_original>
// kernel: tpu_custom_call.1
$region0: #{tpu_custom_call.1}
  #allocation0 [shape = 'u32[]', space=smem, size = 0x4, offset = 0x4, fixed_abs, tag = 'smem constant byte address 0x4 - core index']
  #allocation1 [shape = 'u32[144,128]{1,0:T(1,128)}', space=vmem, size = 0x12000, scoped, tag = 'internal scratch']
  %s0 = inlined_call_operand.vmem [shape: f32[192,32], index: 0, kind: input, shape index: {}]
  %s1 = inlined_call_operand.vmem [shape: f32[192,4], index: 1, kind: input, shape index: {}]
  %s2 = inlined_call_operand.vmem [shape: bf16[32,32], index: 2, kind: input, shape index: {}]
  %s3 = inlined_call_operand.vmem [shape: f32[1,32], index: 3, kind: input, shape index: {}]
  %s4 = inlined_call_operand.vmem [shape: bf16[32,32], index: 4, kind: input, shape index: {}]
  %s5 = inlined_call_operand.vmem [shape: f32[1,32], index: 5, kind: input, shape index: {}]
  %s6 = inlined_call_operand.vmem [shape: bf16[32,128], index: 6, kind: input, shape index: {}]
  %s7 = inlined_call_operand.vmem [shape: bf16[32,128], index: 7, kind: input, shape index: {}]
  %s8 = inlined_call_operand.vmem [shape: f32[1,128], index: 8, kind: input, shape index: {}]
  %s9 = inlined_call_operand.vmem [shape: f32[4,128], index: 9, kind: input, shape index: {}]
  %s10 = inlined_call_operand.hbm [shape: f32[192,128], index: 10, kind: output, shape index: {}]
  %s11 = sld [smem:[#allocation0]]
  $region73: #{tpu_custom_call.1} parent=0
    _
  %s13 = ssub.s32 1, %s11
  %s14 = scalar_select 0, %s13, %s11
  $region1: #{tpu_custom_call.1} parent=0
    #allocation2 [shape = 'u8[98304]{0}', space=vmem, size = 0x18000, scoped, tag = 'output window, operand 0']
    #allocation3 [shape = 's32[2]{0}', space=sflag, size = 0x8, scoped, tag = 'scoped memory for tpu_custom_call.1']
    %15 = vsyncpa [#allocation3], 0
    %s16 = scalar_lea.sflag [#allocation3], 1
    %17 = vsyncpa %s16, 0
    loop: start=0, step=1, limit=4
    $region2: #{tpu_custom_call.1} parent=1 // loop_pre_header
      _
    $region3: #{tpu_custom_call.1} parent=1 // loop_header
      %s19 = sphi 0, %s23
      %p20 = scmp.ge.s32.totalorder %s19, 4
      %s29 = sphi 0, %s31
      %s32 = sphi 0, %s29
      %s33 = sphi 0, %s32
      %s49 = sphi 0, %s33
      %s55 = sphi 0, %s57
      %s58 = sphi 0, %s55
      %s59 = sphi 0, %s58
      %s75 = sphi 0, %s59
      %s79 = sphi 0, %s79
      %s81 = sphi 0, %s79
      %s82 = sphi 0, %s81
      %s96 = sphi 0, %s82
      %s100 = sphi 0, %s100
      %s102 = sphi 0, %s100
      %s103 = sphi 0, %s102
      %s117 = sphi 0, %s103
      %s121 = sphi 0, %s121
      %s123 = sphi 0, %s121
      %s124 = sphi 0, %s123
      %s138 = sphi 0, %s124
      %s142 = sphi 0, %s142
      %s144 = sphi 0, %s142
      %s145 = sphi 0, %s144
      %s159 = sphi 0, %s145
      %s163 = sphi 0, %s163
      %s165 = sphi 0, %s163
      %s166 = sphi 0, %s165
      %s180 = sphi 0, %s166
      %s184 = sphi 0, %s184
      %s186 = sphi 0, %s184
      %s187 = sphi 0, %s186
      %s201 = sphi 0, %s187
      %s205 = sphi 0, %s205
      %s207 = sphi 0, %s205
      %s208 = sphi 0, %s207
      %s222 = sphi 0, %s208
      %s226 = sphi 0, %s226
      %s228 = sphi 0, %s226
      %s229 = sphi 0, %s228
      %s243 = sphi 0, %s229
      %s249 = sphi 0, %s251
      %s252 = sphi 0, %s249
      %s253 = sphi 0, %s252
      %s269 = sphi 0, %s253
    $region4: #{tpu_custom_call.1} parent=1 // loop_header_branch
      %22 = sbr.rel (%p20) target = $region8
    $region5: #{tpu_custom_call.1} parent=1 // loop_body
      %s24 = ssub.s32 %s19, 1
      %s25 = ssub.s32 %s19, 2
      %s26 = sadd.s32 %s19, 1
      %s27 = ssub.s32 %s19, %s26
      %p28 = scmp.eq.s32.totalorder %s27, 0
      %s30 = sadd.s32 %s29, 1
      %s31 = scalar_select %p28, %s29, %s30
      %p34 = pneg %p28
      %p35 = scmp.eq.s32.totalorder %s19, 1
      %p36 = por %p34, %p35
      %p37 = scmp.ne.s32.totalorder %s29, %s32
      %p38 = scmp.eq.s32.totalorder %s19, 0
      %p39 = por %p37, %p38
      %p40 = scmp.ne.s32.totalorder %s29, %s32
      %p41 = scmp.eq.s32.totalorder %s24, 1
      %p42 = por %p40, %p41
      %p43 = scmp.ne.s32.totalorder %s32, %s33
      %p44 = scmp.eq.s32.totalorder %s24, 0
      %p45 = por %p43, %p44
      %p46 = scmp.ne.s32.totalorder %s32, %s33
      %p47 = scmp.eq.s32.totalorder %s25, 1
      %p48 = por %p46, %p47
      %p50 = scmp.ne.s32.totalorder %s33, %s49
      %p51 = scmp.eq.s32.totalorder %s25, 0
      %p52 = por %p50, %p51
      %s53 = ssub.s32 %s19, %s26
      %p54 = scmp.eq.s32.totalorder %s53, 0
      %s56 = sadd.s32 %s55, 1
      %s57 = scalar_select %p54, %s55, %s56
      %p60 = pneg %p54
      %p61 = scmp.eq.s32.totalorder %s19, 1
      %p62 = por %p60, %p61
      %p63 = scmp.ne.s32.totalorder %s55, %s58
      %p64 = scmp.eq.s32.totalorder %s19, 0
      %p65 = por %p63, %p64
      %p66 = scmp.ne.s32.totalorder %s55, %s58
      %p67 = scmp.eq.s32.totalorder %s24, 1
      %p68 = por %p66, %p67
      %p69 = scmp.ne.s32.totalorder %s58, %s59
      %p70 = scmp.eq.s32.totalorder %s24, 0
      %p71 = por %p69, %p70
      %p72 = scmp.ne.s32.totalorder %s58, %s59
      %p73 = scmp.eq.s32.totalorder %s25, 1
      %p74 = por %p72, %p73
      %p76 = scmp.ne.s32.totalorder %s59, %s75
      %p77 = scmp.eq.s32.totalorder %s25, 0
      %p78 = por %p76, %p77
      %s80 = sadd.s32 %s79, 1
      %p83 = scmp.eq.s32.totalorder %s19, 1
      %p84 = scmp.ne.s32.totalorder %s79, %s81
      %p85 = scmp.eq.s32.totalorder %s19, 0
      %p86 = por %p84, %p85
      %p87 = scmp.ne.s32.totalorder %s79, %s81
      %p88 = scmp.eq.s32.totalorder %s24, 1
      %p89 = por %p87, %p88
      %p90 = scmp.ne.s32.totalorder %s81, %s82
      %p91 = scmp.eq.s32.totalorder %s24, 0
      %p92 = por %p90, %p91
      %p93 = scmp.ne.s32.totalorder %s81, %s82
      %p94 = scmp.eq.s32.totalorder %s25, 1
      %p95 = por %p93, %p94
      %p97 = scmp.ne.s32.totalorder %s82, %s96
      %p98 = scmp.eq.s32.totalorder %s25, 0
      %p99 = por %p97, %p98
      %s101 = sadd.s32 %s100, 1
      %p104 = scmp.eq.s32.totalorder %s19, 1
      %p105 = scmp.ne.s32.totalorder %s100, %s102
      %p106 = scmp.eq.s32.totalorder %s19, 0
      %p107 = por %p105, %p106
      %p108 = scmp.ne.s32.totalorder %s100, %s102
      %p109 = scmp.eq.s32.totalorder %s24, 1
      %p110 = por %p108, %p109
      %p111 = scmp.ne.s32.totalorder %s102, %s103
      %p112 = scmp.eq.s32.totalorder %s24, 0
      %p113 = por %p111, %p112
      %p114 = scmp.ne.s32.totalorder %s102, %s103
      %p115 = scmp.eq.s32.totalorder %s25, 1
      %p116 = por %p114, %p115
      %p118 = scmp.ne.s32.totalorder %s103, %s117
      %p119 = scmp.eq.s32.totalorder %s25, 0
      %p120 = por %p118, %p119
      %s122 = sadd.s32 %s121, 1
      %p125 = scmp.eq.s32.totalorder %s19, 1
      %p126 = scmp.ne.s32.totalorder %s121, %s123
      %p127 = scmp.eq.s32.totalorder %s19, 0
      %p128 = por %p126, %p127
      %p129 = scmp.ne.s32.totalorder %s121, %s123
      %p130 = scmp.eq.s32.totalorder %s24, 1
      %p131 = por %p129, %p130
      %p132 = scmp.ne.s32.totalorder %s123, %s124
      %p133 = scmp.eq.s32.totalorder %s24, 0
      %p134 = por %p132, %p133
      %p135 = scmp.ne.s32.totalorder %s123, %s124
      %p136 = scmp.eq.s32.totalorder %s25, 1
      %p137 = por %p135, %p136
      %p139 = scmp.ne.s32.totalorder %s124, %s138
      %p140 = scmp.eq.s32.totalorder %s25, 0
      %p141 = por %p139, %p140
      %s143 = sadd.s32 %s142, 1
      %p146 = scmp.eq.s32.totalorder %s19, 1
      %p147 = scmp.ne.s32.totalorder %s142, %s144
      %p148 = scmp.eq.s32.totalorder %s19, 0
      %p149 = por %p147, %p148
      %p150 = scmp.ne.s32.totalorder %s142, %s144
      %p151 = scmp.eq.s32.totalorder %s24, 1
      %p152 = por %p150, %p151
      %p153 = scmp.ne.s32.totalorder %s144, %s145
      %p154 = scmp.eq.s32.totalorder %s24, 0
      %p155 = por %p153, %p154
      %p156 = scmp.ne.s32.totalorder %s144, %s145
      %p157 = scmp.eq.s32.totalorder %s25, 1
      %p158 = por %p156, %p157
      %p160 = scmp.ne.s32.totalorder %s145, %s159
      %p161 = scmp.eq.s32.totalorder %s25, 0
      %p162 = por %p160, %p161
      %s164 = sadd.s32 %s163, 1
      %p167 = scmp.eq.s32.totalorder %s19, 1
      %p168 = scmp.ne.s32.totalorder %s163, %s165
      %p169 = scmp.eq.s32.totalorder %s19, 0
      %p170 = por %p168, %p169
      %p171 = scmp.ne.s32.totalorder %s163, %s165
      %p172 = scmp.eq.s32.totalorder %s24, 1
      %p173 = por %p171, %p172
      %p174 = scmp.ne.s32.totalorder %s165, %s166
      %p175 = scmp.eq.s32.totalorder %s24, 0
      %p176 = por %p174, %p175
      %p177 = scmp.ne.s32.totalorder %s165, %s166
      %p178 = scmp.eq.s32.totalorder %s25, 1
      %p179 = por %p177, %p178
      %p181 = scmp.ne.s32.totalorder %s166, %s180
      %p182 = scmp.eq.s32.totalorder %s25, 0
      %p183 = por %p181, %p182
      %s185 = sadd.s32 %s184, 1
      %p188 = scmp.eq.s32.totalorder %s19, 1
      %p189 = scmp.ne.s32.totalorder %s184, %s186
      %p190 = scmp.eq.s32.totalorder %s19, 0
      %p191 = por %p189, %p190
      %p192 = scmp.ne.s32.totalorder %s184, %s186
      %p193 = scmp.eq.s32.totalorder %s24, 1
      %p194 = por %p192, %p193
      %p195 = scmp.ne.s32.totalorder %s186, %s187
      %p196 = scmp.eq.s32.totalorder %s24, 0
      %p197 = por %p195, %p196
      %p198 = scmp.ne.s32.totalorder %s186, %s187
      %p199 = scmp.eq.s32.totalorder %s25, 1
      %p200 = por %p198, %p199
      %p202 = scmp.ne.s32.totalorder %s187, %s201
      %p203 = scmp.eq.s32.totalorder %s25, 0
      %p204 = por %p202, %p203
      %s206 = sadd.s32 %s205, 1
      %p209 = scmp.eq.s32.totalorder %s19, 1
      %p210 = scmp.ne.s32.totalorder %s205, %s207
      %p211 = scmp.eq.s32.totalorder %s19, 0
      %p212 = por %p210, %p211
      %p213 = scmp.ne.s32.totalorder %s205, %s207
      %p214 = scmp.eq.s32.totalorder %s24, 1
      %p215 = por %p213, %p214
      %p216 = scmp.ne.s32.totalorder %s207, %s208
      %p217 = scmp.eq.s32.totalorder %s24, 0
      %p218 = por %p216, %p217
      %p219 = scmp.ne.s32.totalorder %s207, %s208
      %p220 = scmp.eq.s32.totalorder %s25, 1
      %p221 = por %p219, %p220
      %p223 = scmp.ne.s32.totalorder %s208, %s222
      %p224 = scmp.eq.s32.totalorder %s25, 0
      %p225 = por %p223, %p224
      %s227 = sadd.s32 %s226, 1
      %p230 = scmp.eq.s32.totalorder %s19, 1
      %p231 = scmp.ne.s32.totalorder %s226, %s228
      %p232 = scmp.eq.s32.totalorder %s19, 0
      %p233 = por %p231, %p232
      %p234 = scmp.ne.s32.totalorder %s226, %s228
      %p235 = scmp.eq.s32.totalorder %s24, 1
      %p236 = por %p234, %p235
      %p237 = scmp.ne.s32.totalorder %s228, %s229
      %p238 = scmp.eq.s32.totalorder %s24, 0
      %p239 = por %p237, %p238
      %p240 = scmp.ne.s32.totalorder %s228, %s229
      %p241 = scmp.eq.s32.totalorder %s25, 1
      %p242 = por %p240, %p241
      %p244 = scmp.ne.s32.totalorder %s229, %s243
      %p245 = scmp.eq.s32.totalorder %s25, 0
      %p246 = por %p244, %p245
      %s247 = ssub.s32 %s19, %s26
      %p248 = scmp.eq.s32.totalorder %s247, 0
      %s250 = sadd.s32 %s249, 1
      %s251 = scalar_select %p248, %s249, %s250
      %p254 = pneg %p248
      %p255 = scmp.eq.s32.totalorder %s19, 1
      %p256 = por %p254, %p255
      %p257 = scmp.ne.s32.totalorder %s249, %s252
      %p258 = scmp.eq.s32.totalorder %s19, 0
      %p259 = por %p257, %p258
      %p260 = scmp.ne.s32.totalorder %s249, %s252
      %p261 = scmp.eq.s32.totalorder %s24, 1
      %p262 = por %p260, %p261
      %p263 = scmp.ne.s32.totalorder %s252, %s253
      %p264 = scmp.eq.s32.totalorder %s24, 0
      %p265 = por %p263, %p264
      %p266 = scmp.ne.s32.totalorder %s252, %s253
      %p267 = scmp.eq.s32.totalorder %s25, 1
      %p268 = por %p266, %p267
      %p270 = scmp.ne.s32.totalorder %s253, %s269
      %p271 = scmp.eq.s32.totalorder %s25, 0
      %p272 = por %p270, %p271
      %p273 = scmp.le.s32.totalorder 1, %s19
      %p274 = scmp.lt.s32.totalorder %s19, 3
      %p275 = pnand %p273, %p274
      %p276 = pneg %p275
      // Predicated region
      $region9: #{tpu_custom_call.1} parent=5 // pred_check
        _
      $region10: #{tpu_custom_call.1} parent=5 // pred_check_branch
        %278 = sbr.rel (%p275) target = $region12
      $region11: #{tpu_custom_call.1} parent=5 // pred_region
        %s279 = ssub.s32 %s19, 1
        // Predicated region
        $region13: #{tpu_custom_call.1} parent=11 // pred_check
          %p280 = pneg %p92
        $region14: #{tpu_custom_call.1} parent=11 // pred_check_branch
          %282 = sbr.rel (%p280) target = $region16
        $region15: #{tpu_custom_call.1} parent=11 // pred_region
          _
        $region16: #{tpu_custom_call.1} parent=11 // pred_fallthru
          _
        // Predicated region
        $region17: #{tpu_custom_call.1} parent=11 // pred_check
          %p283 = pneg %p113
        $region18: #{tpu_custom_call.1} parent=11 // pred_check_branch
          %285 = sbr.rel (%p283) target = $region20
        $region19: #{tpu_custom_call.1} parent=11 // pred_region
          _
        $region20: #{tpu_custom_call.1} parent=11 // pred_fallthru
          _
        // Predicated region
        $region21: #{tpu_custom_call.1} parent=11 // pred_check
          %p286 = pneg %p134
        $region22: #{tpu_custom_call.1} parent=11 // pred_check_branch
          %288 = sbr.rel (%p286) target = $region24
        $region23: #{tpu_custom_call.1} parent=11 // pred_region
          _
        $region24: #{tpu_custom_call.1} parent=11 // pred_fallthru
          _
        // Predicated region
        $region25: #{tpu_custom_call.1} parent=11 // pred_check
          %p289 = pneg %p155
        $region26: #{tpu_custom_call.1} parent=11 // pred_check_branch
          %291 = sbr.rel (%p289) target = $region28
        $region27: #{tpu_custom_call.1} parent=11 // pred_region
          _
        $region28: #{tpu_custom_call.1} parent=11 // pred_fallthru
          _
        // Predicated region
        $region29: #{tpu_custom_call.1} parent=11 // pred_check
          %p292 = pneg %p176
        $region30: #{tpu_custom_call.1} parent=11 // pred_check_branch
          %294 = sbr.rel (%p292) target = $region32
        $region31: #{tpu_custom_call.1} parent=11 // pred_region
          _
        $region32: #{tpu_custom_call.1} parent=11 // pred_fallthru
          _
        // Predicated region
        $region33: #{tpu_custom_call.1} parent=11 // pred_check
          %p295 = pneg %p197
        $region34: #{tpu_custom_call.1} parent=11 // pred_check_branch
          %297 = sbr.rel (%p295) target = $region36
        $region35: #{tpu_custom_call.1} parent=11 // pred_region
          _
        $region36: #{tpu_custom_call.1} parent=11 // pred_fallthru
          _
        // Predicated region
        $region37: #{tpu_custom_call.1} parent=11 // pred_check
          %p298 = pneg %p218
        $region38: #{tpu_custom_call.1} parent=11 // pred_check_branch
          %300 = sbr.rel (%p298) target = $region40
        $region39: #{tpu_custom_call.1} parent=11 // pred_region
          _
        $region40: #{tpu_custom_call.1} parent=11 // pred_fallthru
          _
        // Predicated region
        $region41: #{tpu_custom_call.1} parent=11 // pred_check
          %p301 = pneg %p239
        $region42: #{tpu_custom_call.1} parent=11 // pred_check_branch
          %303 = sbr.rel (%p301) target = $region44
        $region43: #{tpu_custom_call.1} parent=11 // pred_region
          _
        $region44: #{tpu_custom_call.1} parent=11 // pred_fallthru
          _
      $region12: #{tpu_custom_call.1} parent=5 // pred_fallthru
        _
      %p304 = scmp.lt.s32.totalorder %s19, 2
      // Predicated region
      $region45: #{tpu_custom_call.1} parent=5 // pred_check
        %p305 = pneg %p304
      $region46: #{tpu_custom_call.1} parent=5 // pred_check_branch
        %307 = sbr.rel (%p305) target = $region48
      $region47: #{tpu_custom_call.1} parent=5 // pred_region
        // Predicated region
        $region49: #{tpu_custom_call.1} parent=47 // pred_check
          %p308 = pneg %p39
        $region50: #{tpu_custom_call.1} parent=47 // pred_check_branch
          %310 = sbr.rel (%p308) target = $region52
        $region51: #{tpu_custom_call.1} parent=47 // pred_region
          %s311 = smul.u32 12, %s19
          %p312 = scmp.lt.s32.totalorder %s311, 23
          %s313 = scalar_select %p312, %s311, 23
          %s314 = smul.addr %s313, 8
          %s315 = scalar_lea.vmem %s0, %s314
          %s316 = smul.u32 12, %s19
        $region52: #{tpu_custom_call.1} parent=47 // pred_fallthru
          _
        // Predicated region
        $region53: #{tpu_custom_call.1} parent=47 // pred_check
          %p317 = pneg %p65
        $region54: #{tpu_custom_call.1} parent=47 // pred_check_branch
          %319 = sbr.rel (%p317) target = $region56
        $region55: #{tpu_custom_call.1} parent=47 // pred_region
          %s320 = smul.u32 12, %s19
          %p321 = scmp.lt.s32.totalorder %s320, 23
          %s322 = scalar_select %p321, %s320, 23
          %s323 = smul.addr %s322, 8
          %s324 = scalar_lea.vmem %s1, %s323
          %s325 = smul.u32 12, %s19
        $region56: #{tpu_custom_call.1} parent=47 // pred_fallthru
          _
      $region48: #{tpu_custom_call.1} parent=5 // pred_fallthru
        _
      %p326 = scmp.le.s32.totalorder 1, %s19
      %p327 = scmp.lt.s32.totalorder %s19, 3
      %p328 = pnand %p326, %p327
      %p329 = pneg %p328
      // Predicated region
      $region57: #{tpu_custom_call.1} parent=5 // pred_check
        _
      $region58: #{tpu_custom_call.1} parent=5 // pred_check_branch
        %331 = sbr.rel (%p328) target = $region60
      $region59: #{tpu_custom_call.1} parent=5 // pred_region
        %s332 = ssub.s32 %s19, 1
        %s333 = smul.u32 12, %s24
        %p334 = scmp.lt.s32.totalorder %s333, 23
        %s335 = scalar_select %p334, %s333, 23
        %s336 = smul.addr %s335, 8
        %s337 = scalar_lea.vmem %s0, %s336
        %p338 = pneg %p45
        %p339 = pneg %p42
        %s340 = smul.u32 12, %s24
        %p341 = scmp.lt.s32.totalorder %s340, 23
        %s342 = scalar_select %p341, %s340, 23
        %s343 = smul.addr %s342, 8
        %s344 = scalar_lea.vmem %s1, %s343
        %p345 = pneg %p71
        %p346 = pneg %p68
        %p347 = pneg %p92
        %p348 = pneg %p89
        %p349 = pneg %p113
        %p350 = pneg %p110
        %p351 = pneg %p134
        %p352 = pneg %p131
        %p353 = pneg %p155
        %p354 = pneg %p152
        %p355 = pneg %p176
        %p356 = pneg %p173
        %p357 = pneg %p197
        %p358 = pneg %p194
        %p359 = pneg %p218
        %p360 = pneg %p215
        %p361 = pneg %p239
        %p362 = pneg %p236
        %p363 = pneg %p265
        %p364 = pneg %p262
        %s365 = sand.u32 %s252, 1
        %s366 = scalar_lea.sflag [#allocation3], %s365
        %s367 = sand.u32 %s252, 1
        %s368 = smul.addr %s367, 96
        %s369 = scalar_lea.vmem [#allocation2], %s368
        %s370 = smul.u32 12, %s24
        %p371 = scmp.lt.s32.totalorder %s370, 23
        %s372 = scalar_select %p371, %s370, 23
        %s373 = smul.addr %s372, 8
        %s374 = scalar_lea.vmem %s0, %s373
        %s375 = smul.u32 12, %s24
        %s376 = smul.u32 12, %s24
        %p377 = scmp.lt.s32.totalorder %s376, 23
        %s378 = scalar_select %p377, %s376, 23
        %s379 = smul.addr %s378, 8
        %s380 = scalar_lea.vmem %s1, %s379
        %s381 = smul.u32 12, %s24
        %s382 = smul.u32 12, %s24
        %v384 = vld [vmem:[%s374] sm:$0xff]
        %v385 = vld [vmem:[%s374 + $0x8] sm:$0xff]
        %v386 = vld [vmem:[%s374 + $0x10] sm:$0xff]
        %v387 = vld [vmem:[%s374 + $0x18] sm:$0xff]
        %v388 = vld [vmem:[%s374 + $0x20] sm:$0xff]
        %v389 = vld [vmem:[%s374 + $0x28] sm:$0xff]
        %v390 = vld [vmem:[%s374 + $0x30] sm:$0xff]
        %v391 = vld [vmem:[%s374 + $0x38] sm:$0xff]
        %v392 = vld [vmem:[%s374 + $0x40] sm:$0xff]
        %v393 = vld [vmem:[%s374 + $0x48] sm:$0xff]
        %v394 = vld [vmem:[%s374 + $0x50] sm:$0xff]
        %v395 = vld [vmem:[%s374 + $0x58] sm:$0xff]
        %v396 = vpack.c.bf16 %v385, %v384
        %v397 = vpack.c.bf16 %v387, %v386
        %v398 = vpack.c.bf16 %v389, %v388
        %v399 = vpack.c.bf16 %v391, %v390
        %v400 = vpack.c.bf16 %v393, %v392
        %v401 = vpack.c.bf16 %v395, %v394
        %v402 = vld [vmem:[%s2] sm:$0xf]
        %v403 = vld [vmem:[%s2 + $0x4] sm:$0xf]
        %v404 = vld [vmem:[%s2 + $0x8] sm:$0xf]
        %v405 = vld [vmem:[%s2 + $0xc] sm:$0xf]
        %v406 = vld [vmem:[%s3] sm:$0x1]
        %v408 = vlaneseq
        %v409 = vshrl.u32 %v408, 7
        %v410 = vsub.s32 0, %v409
        %v411 = vrot.slane %v406, %v410
        %v417 = vunpack.c.l.b16 %v402
        %v418 = vunpack.c.l.b16 %v403
        %v419 = vunpack.c.l.b16 %v404
        %v420 = vunpack.c.l.b16 %v405
        %v421 = vpack.c.b16 %v418, %v417
        %v422 = vpack.c.b16 %v420, %v419
        %vm425 = vcmask 261120
        %v427 = vsel %vm425, %v396, 0
        %v430 = vsel %vm425, %v397, 0
        %v433 = vsel %vm425, %v398, 0
        %v436 = vsel %vm425, %v399, 0
        %v439 = vsel %vm425, %v400, 0
        %v442 = vsel %vm425, %v401, 0
        %444 = vmatprep.subr.bf16.mxu0 0
        %445 = vmatpush1.bf16.msra.mxu0 %v421
        %446 = vmatprep.subr.bf16.mxu0 0
        %447 = vmatpush1.bf16.msra.mxu0 %v422
        %448 = vmatprep.subr.bf16.mxu0 0
        %449 = vmatpush1.bf16.msra.mxu0 0
        %450 = vmatprep.subr.bf16.mxu0 0
        %451 = vmatpush1.bf16.msra.mxu0 0
        %452 = vmatprep.subr.bf16.mxu0 0
        %453 = vmatpush1.bf16.msra.mxu0 0
        %454 = vmatprep.subr.bf16.mxu0 0
        %455 = vmatpush1.bf16.msra.mxu0 0
        %456 = vmatprep.subr.bf16.mxu0 0
        %457 = vmatpush1.bf16.msra.mxu0 0
        %458 = vmatprep.subr.bf16.mxu0 0
        %459 = vmatpush1.bf16.msra.mxu0 0
        %460 = vmatprep.subr.bf16.mxu0 0
        %461 = vmatpush1.bf16.msra.mxu0 0
        %462 = vmatprep.subr.bf16.mxu0 0
        %463 = vmatpush1.bf16.msra.mxu0 0
        %464 = vmatprep.subr.bf16.mxu0 0
        %465 = vmatpush1.bf16.msra.mxu0 0
        %466 = vmatprep.subr.bf16.mxu0 0
        %467 = vmatpush1.bf16.msra.mxu0 0
        %468 = vmatprep.subr.bf16.mxu0 0
        %469 = vmatpush1.bf16.msra.mxu0 0
        %470 = vmatprep.subr.bf16.mxu0 0
        %471 = vmatpush1.bf16.msra.mxu0 0
        %472 = vmatprep.subr.bf16.mxu0 0
        %473 = vmatpush1.bf16.msra.mxu0 0
        %474 = vmatprep.subr.bf16.mxu0 0
        %475 = vmatpush1.bf16.msra.mxu0 0
        %476 = vmatprep.mubr.bf16.mxu0 0
        %477 = vmatmul.mubr.bf16.gmra.mrb[0].mxu0 %v427
        %v478 = vpop.f32.mrb[0].mxu0
        %v479 = vadd.f32 %v411, %v478
        %v480 = vpop.f32.mrb[0].mxu0
        %v481 = vpop.f32.mrb[0].mxu0
        %v482 = vadd.f32 %v411, %v481
        %v483 = vpop.f32.mrb[0].mxu0
        %484 = vmatprep.mubr.bf16.mxu0 0
        %485 = vmatmul.mubr.bf16.gmra.mrb[0].mxu0 %v430
        %v486 = vpop.f32.mrb[0].mxu0
        %v487 = vadd.f32 %v411, %v486
        %v488 = vpop.f32.mrb[0].mxu0
        %v489 = vpop.f32.mrb[0].mxu0
        %v490 = vadd.f32 %v411, %v489
        %v491 = vpop.f32.mrb[0].mxu0
        %492 = vmatprep.mubr.bf16.mxu0 0
        %493 = vmatmul.mubr.bf16.gmra.mrb[0].mxu0 %v433
        %v494 = vpop.f32.mrb[0].mxu0
        %v495 = vadd.f32 %v411, %v494
        %v496 = vpop.f32.mrb[0].mxu0
        %v497 = vpop.f32.mrb[0].mxu0
        %v498 = vadd.f32 %v411, %v497
        %v499 = vpop.f32.mrb[0].mxu0
        %500 = vmatprep.mubr.bf16.mxu0 0
        %501 = vmatmul.mubr.bf16.gmra.mrb[0].mxu0 %v436
        %v502 = vpop.f32.mrb[0].mxu0
        %v503 = vadd.f32 %v411, %v502
        %v504 = vpop.f32.mrb[0].mxu0
        %v505 = vpop.f32.mrb[0].mxu0
        %v506 = vadd.f32 %v411, %v505
        %v507 = vpop.f32.mrb[0].mxu0
        %508 = vmatprep.mubr.bf16.mxu0 0
        %509 = vmatmul.mubr.bf16.gmra.mrb[0].mxu0 %v439
        %v510 = vpop.f32.mrb[0].mxu0
        %v511 = vadd.f32 %v411, %v510
        %v512 = vpop.f32.mrb[0].mxu0
        %v513 = vpop.f32.mrb[0].mxu0
        %v514 = vadd.f32 %v411, %v513
        %v515 = vpop.f32.mrb[0].mxu0
        %516 = vmatprep.mubr.bf16.mxu0 0
        %517 = vmatmul.mubr.bf16.gmra.mrb[0].mxu0 %v442
        %v518 = vpop.f32.mrb[0].mxu0
        %v519 = vadd.f32 %v411, %v518
        %v520 = vpop.f32.mrb[0].mxu0
        %v521 = vpop.f32.mrb[0].mxu0
        %v522 = vadd.f32 %v411, %v521
        %v523 = vpop.f32.mrb[0].mxu0
        %524 = vdwg.mxu0
        %v525 = vmax.f32 %v479, 0.0
        %v526 = vmax.f32 %v482, 0.0
        %v527 = vmax.f32 %v487, 0.0
        %v528 = vmax.f32 %v490, 0.0
        %v529 = vmax.f32 %v495, 0.0
        %v530 = vmax.f32 %v498, 0.0
        %v531 = vmax.f32 %v503, 0.0
        %v532 = vmax.f32 %v506, 0.0
        %v533 = vmax.f32 %v511, 0.0
        %v534 = vmax.f32 %v514, 0.0
        %v535 = vmax.f32 %v519, 0.0
        %v536 = vmax.f32 %v522, 0.0
        %v537 = vpack.c.bf16 %v526, %v525
        %v538 = vpack.c.bf16 %v528, %v527
        %v539 = vpack.c.bf16 %v530, %v529
        %v540 = vpack.c.bf16 %v532, %v531
        %v541 = vpack.c.bf16 %v534, %v533
        %v542 = vpack.c.bf16 %v536, %v535
        %v543 = vld [vmem:[%s4] sm:$0xf]
        %v544 = vld [vmem:[%s4 + $0x4] sm:$0xf]
        %v545 = vld [vmem:[%s4 + $0x8] sm:$0xf]
        %v546 = vld [vmem:[%s4 + $0xc] sm:$0xf]
        %v547 = vld [vmem:[%s5] sm:$0x1]
        %v549 = vlaneseq
        %v550 = vshrl.u32 %v549, 7
        %v551 = vsub.s32 0, %v550
        %v552 = vrot.slane %v547, %v551
        %v558 = vunpack.c.l.b16 %v543
        %v559 = vunpack.c.l.b16 %v544
        %v560 = vunpack.c.l.b16 %v545
        %v561 = vunpack.c.l.b16 %v546
        %v562 = vpack.c.b16 %v559, %v558
        %v563 = vpack.c.b16 %v561, %v560
        %v567 = vsel %vm425, %v537, 0
        %v570 = vsel %vm425, %v538, 0
        %v573 = vsel %vm425, %v539, 0
        %v576 = vsel %vm425, %v540, 0
        %v579 = vsel %vm425, %v541, 0
        %v582 = vsel %vm425, %v542, 0
        %584 = vmatprep.subr.bf16.mxu0 0
        %585 = vmatpush1.bf16.msra.mxu0 %v562
        %586 = vmatprep.subr.bf16.mxu0 0
        %587 = vmatpush1.bf16.msra.mxu0 %v563
        %588 = vmatprep.subr.bf16.mxu0 0
        %589 = vmatpush1.bf16.msra.mxu0 0
        %590 = vmatprep.subr.bf16.mxu0 0
        %591 = vmatpush1.bf16.msra.mxu0 0
        %592 = vmatprep.subr.bf16.mxu0 0
        %593 = vmatpush1.bf16.msra.mxu0 0
        %594 = vmatprep.subr.bf16.mxu0 0
        %595 = vmatpush1.bf16.msra.mxu0 0
        %596 = vmatprep.subr.bf16.mxu0 0
        %597 = vmatpush1.bf16.msra.mxu0 0
        %598 = vmatprep.subr.bf16.mxu0 0
        %599 = vmatpush1.bf16.msra.mxu0 0
        %600 = vmatprep.subr.bf16.mxu0 0
        %601 = vmatpush1.bf16.msra.mxu0 0
        %602 = vmatprep.subr.bf16.mxu0 0
        %603 = vmatpush1.bf16.msra.mxu0 0
        %604 = vmatprep.subr.bf16.mxu0 0
        %605 = vmatpush1.bf16.msra.mxu0 0
        %606 = vmatprep.subr.bf16.mxu0 0
        %607 = vmatpush1.bf16.msra.mxu0 0
        %608 = vmatprep.subr.bf16.mxu0 0
        %609 = vmatpush1.bf16.msra.mxu0 0
        %610 = vmatprep.subr.bf16.mxu0 0
        %611 = vmatpush1.bf16.msra.mxu0 0
        %612 = vmatprep.subr.bf16.mxu0 0
        %613 = vmatpush1.bf16.msra.mxu0 0
        %614 = vmatprep.subr.bf16.mxu0 0
        %615 = vmatpush1.bf16.msra.mxu0 0
        %616 = vmatprep.mubr.bf16.mxu0 0
        %617 = vmatmul.mubr.bf16.gmra.mrb[0].mxu0 %v567
        %v618 = vpop.f32.mrb[0].mxu0
        %v619 = vadd.f32 %v552, %v618
        %v620 = vpop.f32.mrb[0].mxu0
        %v621 = vpop.f32.mrb[0].mxu0
        %v622 = vadd.f32 %v552, %v621
        %v623 = vpop.f32.mrb[0].mxu0
        %624 = vmatprep.mubr.bf16.mxu0 0
        %625 = vmatmul.mubr.bf16.gmra.mrb[0].mxu0 %v570
        %v626 = vpop.f32.mrb[0].mxu0
        %v627 = vadd.f32 %v552, %v626
        %v628 = vpop.f32.mrb[0].mxu0
        %v629 = vpop.f32.mrb[0].mxu0
        %v630 = vadd.f32 %v552, %v629
        %v631 = vpop.f32.mrb[0].mxu0
        %632 = vmatprep.mubr.bf16.mxu0 0
        %633 = vmatmul.mubr.bf16.gmra.mrb[0].mxu0 %v573
        %v634 = vpop.f32.mrb[0].mxu0
        %v635 = vadd.f32 %v552, %v634
        %v636 = vpop.f32.mrb[0].mxu0
        %v637 = vpop.f32.mrb[0].mxu0
        %v638 = vadd.f32 %v552, %v637
        %v639 = vpop.f32.mrb[0].mxu0
        %640 = vmatprep.mubr.bf16.mxu0 0
        %641 = vmatmul.mubr.bf16.gmra.mrb[0].mxu0 %v576
        %v642 = vpop.f32.mrb[0].mxu0
        %v643 = vadd.f32 %v552, %v642
        %v644 = vpop.f32.mrb[0].mxu0
        %v645 = vpop.f32.mrb[0].mxu0
        %v646 = vadd.f32 %v552, %v645
        %v647 = vpop.f32.mrb[0].mxu0
        %648 = vmatprep.mubr.bf16.mxu0 0
        %649 = vmatmul.mubr.bf16.gmra.mrb[0].mxu0 %v579
        %v650 = vpop.f32.mrb[0].mxu0
        %v651 = vadd.f32 %v552, %v650
        %v652 = vpop.f32.mrb[0].mxu0
        %v653 = vpop.f32.mrb[0].mxu0
        %v654 = vadd.f32 %v552, %v653
        %v655 = vpop.f32.mrb[0].mxu0
        %656 = vmatprep.mubr.bf16.mxu0 0
        %657 = vmatmul.mubr.bf16.gmra.mrb[0].mxu0 %v582
        %v658 = vpop.f32.mrb[0].mxu0
        %v659 = vadd.f32 %v552, %v658
        %v660 = vpop.f32.mrb[0].mxu0
        %v661 = vpop.f32.mrb[0].mxu0
        %v662 = vadd.f32 %v552, %v661
        %v663 = vpop.f32.mrb[0].mxu0
        %664 = vdwg.mxu0
        %v665 = vmax.f32 %v619, 0.0
        %v666 = vmax.f32 %v622, 0.0
        %v667 = vmax.f32 %v627, 0.0
        %v668 = vmax.f32 %v630, 0.0
        %v669 = vmax.f32 %v635, 0.0
        %v670 = vmax.f32 %v638, 0.0
        %v671 = vmax.f32 %v643, 0.0
        %v672 = vmax.f32 %v646, 0.0
        %v673 = vmax.f32 %v651, 0.0
        %v674 = vmax.f32 %v654, 0.0
        %v675 = vmax.f32 %v659, 0.0
        %v676 = vmax.f32 %v662, 0.0
        %v677 = vpack.c.bf16 %v666, %v665
        %v678 = vpack.c.bf16 %v668, %v667
        %v679 = vpack.c.bf16 %v670, %v669
        %v680 = vpack.c.bf16 %v672, %v671
        %v681 = vpack.c.bf16 %v674, %v673
        %v682 = vpack.c.bf16 %v676, %v675
        %v683 = vld [vmem:[%s6] sm:$0xf]
        %v684 = vld [vmem:[%s6 + $0x4] sm:$0xf]
        %v685 = vld [vmem:[%s6 + $0x8] sm:$0xf]
        %v686 = vld [vmem:[%s6 + $0xc] sm:$0xf]
        %v687 = vld [vmem:[%s7] sm:$0xf]
        %v688 = vld [vmem:[%s7 + $0x4] sm:$0xf]
        %v689 = vld [vmem:[%s7 + $0x8] sm:$0xf]
        %v690 = vld [vmem:[%s7 + $0xc] sm:$0xf]
        %v695 = vunpack.c.l.b16 %v687
        %v696 = vunpack.c.l.b16 %v688
        %v697 = vunpack.c.l.b16 %v689
        %v698 = vunpack.c.l.b16 %v690
        %v699 = vpack.c.b16 %v696, %v695
        %v700 = vpack.c.b16 %v698, %v697
        %703 = vmatprep.subr.bf16.mxu0 0
        %704 = vmatpush1.bf16.msra.mxu0 %v699
        %705 = vmatprep.subr.bf16.mxu0 0
        %706 = vmatpush1.bf16.msra.mxu0 %v700
        %707 = vmatprep.subr.bf16.mxu0 0
        %708 = vmatpush1.bf16.msra.mxu0 0
        %709 = vmatprep.subr.bf16.mxu0 0
        %710 = vmatpush1.bf16.msra.mxu0 0
        %711 = vmatprep.subr.bf16.mxu0 0
        %712 = vmatpush1.bf16.msra.mxu0 0
        %713 = vmatprep.subr.bf16.mxu0 0
        %714 = vmatpush1.bf16.msra.mxu0 0
        %715 = vmatprep.subr.bf16.mxu0 0
        %716 = vmatpush1.bf16.msra.mxu0 0
        %717 = vmatprep.subr.bf16.mxu0 0
        %718 = vmatpush1.bf16.msra.mxu0 0
        %719 = vmatprep.subr.bf16.mxu0 0
        %720 = vmatpush1.bf16.msra.mxu0 0
        %721 = vmatprep.subr.bf16.mxu0 0
        %722 = vmatpush1.bf16.msra.mxu0 0
        %723 = vmatprep.subr.bf16.mxu0 0
        %724 = vmatpush1.bf16.msra.mxu0 0
        %725 = vmatprep.subr.bf16.mxu0 0
        %726 = vmatpush1.bf16.msra.mxu0 0
        %727 = vmatprep.subr.bf16.mxu0 0
        %728 = vmatpush1.bf16.msra.mxu0 0
        %729 = vmatprep.subr.bf16.mxu0 0
        %730 = vmatpush1.bf16.msra.mxu0 0
        %731 = vmatprep.subr.bf16.mxu0 0
        %732 = vmatpush1.bf16.msra.mxu0 0
        %733 = vmatprep.subr.bf16.mxu0 0
        %734 = vmatpush1.bf16.msra.mxu0 0
        %735 = vmatprep.mubr.bf16.mxu0 0
        %736 = vmatmul.mubr.bf16.gmra.mrb[0].mxu0 %v427
        %v737 = vpop.f32.mrb[0].mxu0
        %v738 = vadd.f32 0.0, %v737
        %v739 = vpop.f32.mrb[0].mxu0
        %v740 = vpop.f32.mrb[0].mxu0
        %v741 = vadd.f32 0.0, %v740
        %v742 = vpop.f32.mrb[0].mxu0
        %743 = vmatprep.mubr.bf16.mxu0 0
        %744 = vmatmul.mubr.bf16.gmra.mrb[0].mxu0 %v430
        %v745 = vpop.f32.mrb[0].mxu0
        %v746 = vadd.f32 0.0, %v745
        %v747 = vpop.f32.mrb[0].mxu0
        %v748 = vpop.f32.mrb[0].mxu0
        %v749 = vadd.f32 0.0, %v748
        %v750 = vpop.f32.mrb[0].mxu0
        %751 = vmatprep.mubr.bf16.mxu0 0
        %752 = vmatmul.mubr.bf16.gmra.mrb[0].mxu0 %v433
        %v753 = vpop.f32.mrb[0].mxu0
        %v754 = vadd.f32 0.0, %v753
        %v755 = vpop.f32.mrb[0].mxu0
        %v756 = vpop.f32.mrb[0].mxu0
        %v757 = vadd.f32 0.0, %v756
        %v758 = vpop.f32.mrb[0].mxu0
        %759 = vmatprep.mubr.bf16.mxu0 0
        %760 = vmatmul.mubr.bf16.gmra.mrb[0].mxu0 %v436
        %v761 = vpop.f32.mrb[0].mxu0
        %v762 = vadd.f32 0.0, %v761
        %v763 = vpop.f32.mrb[0].mxu0
        %v764 = vpop.f32.mrb[0].mxu0
        %v765 = vadd.f32 0.0, %v764
        %v766 = vpop.f32.mrb[0].mxu0
        %767 = vmatprep.mubr.bf16.mxu0 0
        %768 = vmatmul.mubr.bf16.gmra.mrb[0].mxu0 %v439
        %v769 = vpop.f32.mrb[0].mxu0
        %v770 = vadd.f32 0.0, %v769
        %v771 = vpop.f32.mrb[0].mxu0
        %v772 = vpop.f32.mrb[0].mxu0
        %v773 = vadd.f32 0.0, %v772
        %v774 = vpop.f32.mrb[0].mxu0
        %775 = vmatprep.mubr.bf16.mxu0 0
        %776 = vmatmul.mubr.bf16.gmra.mrb[0].mxu0 %v442
        %v777 = vpop.f32.mrb[0].mxu0
        %v778 = vadd.f32 0.0, %v777
        %v779 = vpop.f32.mrb[0].mxu0
        %v780 = vpop.f32.mrb[0].mxu0
        %v781 = vadd.f32 0.0, %v780
        %v782 = vpop.f32.mrb[0].mxu0
        %783 = vdwg.mxu0
        %v788 = vunpack.c.l.b16 %v683
        %v789 = vunpack.c.l.b16 %v684
        %v790 = vunpack.c.l.b16 %v685
        %v791 = vunpack.c.l.b16 %v686
        %v792 = vpack.c.b16 %v789, %v788
        %v793 = vpack.c.b16 %v791, %v790
        %v797 = vsel %vm425, %v677, 0
        %v800 = vsel %vm425, %v678, 0
        %v803 = vsel %vm425, %v679, 0
        %v806 = vsel %vm425, %v680, 0
        %v809 = vsel %vm425, %v681, 0
        %v812 = vsel %vm425, %v682, 0
        %814 = vmatprep.subr.bf16.mxu0 0
        %815 = vmatpush1.bf16.msra.mxu0 %v792
        %816 = vmatprep.subr.bf16.mxu0 0
        %817 = vmatpush1.bf16.msra.mxu0 %v793
        %818 = vmatprep.subr.bf16.mxu0 0
        %819 = vmatpush1.bf16.msra.mxu0 0
        %820 = vmatprep.subr.bf16.mxu0 0
        %821 = vmatpush1.bf16.msra.mxu0 0
        %822 = vmatprep.subr.bf16.mxu0 0
        %823 = vmatpush1.bf16.msra.mxu0 0
        %824 = vmatprep.subr.bf16.mxu0 0
        %825 = vmatpush1.bf16.msra.mxu0 0
        %826 = vmatprep.subr.bf16.mxu0 0
        %827 = vmatpush1.bf16.msra.mxu0 0
        %828 = vmatprep.subr.bf16.mxu0 0
        %829 = vmatpush1.bf16.msra.mxu0 0
        %830 = vmatprep.subr.bf16.mxu0 0
        %831 = vmatpush1.bf16.msra.mxu0 0
        %832 = vmatprep.subr.bf16.mxu0 0
        %833 = vmatpush1.bf16.msra.mxu0 0
        %834 = vmatprep.subr.bf16.mxu0 0
        %835 = vmatpush1.bf16.msra.mxu0 0
        %836 = vmatprep.subr.bf16.mxu0 0
        %837 = vmatpush1.bf16.msra.mxu0 0
        %838 = vmatprep.subr.bf16.mxu0 0
        %839 = vmatpush1.bf16.msra.mxu0 0
        %840 = vmatprep.subr.bf16.mxu0 0
        %841 = vmatpush1.bf16.msra.mxu0 0
        %842 = vmatprep.subr.bf16.mxu0 0
        %843 = vmatpush1.bf16.msra.mxu0 0
        %844 = vmatprep.subr.bf16.mxu0 0
        %845 = vmatpush1.bf16.msra.mxu0 0
        %846 = vmatprep.mubr.bf16.mxu0 0
        %847 = vmatmul.mubr.bf16.gmra.mrb[0].mxu0 %v797
        %v848 = vpop.f32.mrb[0].mxu0
        %v849 = vadd.f32 %v738, %v848
        %v850 = vpop.f32.mrb[0].mxu0
        %v851 = vpop.f32.mrb[0].mxu0
        %v852 = vadd.f32 %v741, %v851
        %v853 = vpop.f32.mrb[0].mxu0
        %854 = vmatprep.mubr.bf16.mxu0 0
        %855 = vmatmul.mubr.bf16.gmra.mrb[0].mxu0 %v800
        %v856 = vpop.f32.mrb[0].mxu0
        %v857 = vadd.f32 %v746, %v856
        %v858 = vpop.f32.mrb[0].mxu0
        %v859 = vpop.f32.mrb[0].mxu0
        %v860 = vadd.f32 %v749, %v859
        %v861 = vpop.f32.mrb[0].mxu0
        %862 = vmatprep.mubr.bf16.mxu0 0
        %863 = vmatmul.mubr.bf16.gmra.mrb[0].mxu0 %v803
        %v864 = vpop.f32.mrb[0].mxu0
        %v865 = vadd.f32 %v754, %v864
        %v866 = vpop.f32.mrb[0].mxu0
        %v867 = vpop.f32.mrb[0].mxu0
        %v868 = vadd.f32 %v757, %v867
        %v869 = vpop.f32.mrb[0].mxu0
        %870 = vmatprep.mubr.bf16.mxu0 0
        %871 = vmatmul.mubr.bf16.gmra.mrb[0].mxu0 %v806
        %v872 = vpop.f32.mrb[0].mxu0
        %v873 = vadd.f32 %v762, %v872
        %v874 = vpop.f32.mrb[0].mxu0
        %v875 = vpop.f32.mrb[0].mxu0
        %v876 = vadd.f32 %v765, %v875
        %v877 = vpop.f32.mrb[0].mxu0
        %878 = vmatprep.mubr.bf16.mxu0 0
        %879 = vmatmul.mubr.bf16.gmra.mrb[0].mxu0 %v809
        %v880 = vpop.f32.mrb[0].mxu0
        %v881 = vadd.f32 %v770, %v880
        %v882 = vpop.f32.mrb[0].mxu0
        %v883 = vpop.f32.mrb[0].mxu0
        %v884 = vadd.f32 %v773, %v883
        %v885 = vpop.f32.mrb[0].mxu0
        %886 = vmatprep.mubr.bf16.mxu0 0
        %887 = vmatmul.mubr.bf16.gmra.mrb[0].mxu0 %v812
        %v888 = vpop.f32.mrb[0].mxu0
        %v889 = vadd.f32 %v778, %v888
        %v890 = vpop.f32.mrb[0].mxu0
        %v891 = vpop.f32.mrb[0].mxu0
        %v892 = vadd.f32 %v781, %v891
        %v893 = vpop.f32.mrb[0].mxu0
        %894 = vdwg.mxu0
        %v895 = vld [vmem:[%s8] sm:$0x1]
        %v897 = vlaneseq
        %v898 = vshrl.u32 %v897, 7
        %v899 = vsub.s32 0, %v898
        %v900 = vrot.slane %v895, %v899
        %v902 = vadd.f32 %v849, %v900
        %v903 = vadd.f32 %v852, %v900
        %v904 = vadd.f32 %v857, %v900
        %v905 = vadd.f32 %v860, %v900
        %v906 = vadd.f32 %v865, %v900
        %v907 = vadd.f32 %v868, %v900
        %v908 = vadd.f32 %v873, %v900
        %v909 = vadd.f32 %v876, %v900
        %v910 = vadd.f32 %v881, %v900
        %v911 = vadd.f32 %v884, %v900
        %v912 = vadd.f32 %v889, %v900
        %v913 = vadd.f32 %v892, %v900
        %v914 = vld [vmem:[%s380] sm:$0xff]
        %v915 = vld [vmem:[%s380 + $0x8] sm:$0xff]
        %v916 = vld [vmem:[%s380 + $0x10] sm:$0xff]
        %v917 = vld [vmem:[%s380 + $0x18] sm:$0xff]
        %v918 = vld [vmem:[%s380 + $0x20] sm:$0xff]
        %v919 = vld [vmem:[%s380 + $0x28] sm:$0xff]
        %v920 = vld [vmem:[%s380 + $0x30] sm:$0xff]
        %v921 = vld [vmem:[%s380 + $0x38] sm:$0xff]
        %v922 = vld [vmem:[%s380 + $0x40] sm:$0xff]
        %v923 = vld [vmem:[%s380 + $0x48] sm:$0xff]
        %v924 = vld [vmem:[%s380 + $0x50] sm:$0xff]
        %v925 = vld [vmem:[%s380 + $0x58] sm:$0xff]
        %v926 = vmax.f32 %v914, 0.0
        %v927 = vmax.f32 %v915, 0.0
        %v928 = vmax.f32 %v916, 0.0
        %v929 = vmax.f32 %v917, 0.0
        %v930 = vmax.f32 %v918, 0.0
        %v931 = vmax.f32 %v919, 0.0
        %v932 = vmax.f32 %v920, 0.0
        %v933 = vmax.f32 %v921, 0.0
        %v934 = vmax.f32 %v922, 0.0
        %v935 = vmax.f32 %v923, 0.0
        %v936 = vmax.f32 %v924, 0.0
        %v937 = vmax.f32 %v925, 0.0
        %v938 = vmin.f32 %v926, 1.0
        %v939 = vmin.f32 %v927, 1.0
        %v940 = vmin.f32 %v928, 1.0
        %v941 = vmin.f32 %v929, 1.0
        %v942 = vmin.f32 %v930, 1.0
        %v943 = vmin.f32 %v931, 1.0
        %v944 = vmin.f32 %v932, 1.0
        %v945 = vmin.f32 %v933, 1.0
        %v946 = vmin.f32 %v934, 1.0
        %v947 = vmin.f32 %v935, 1.0
        %v948 = vmin.f32 %v936, 1.0
        %v949 = vmin.f32 %v937, 1.0
        %v950 = vmax.f32 %v938, 1e-05
        %v951 = vmax.f32 %v939, 1e-05
        %v952 = vmax.f32 %v940, 1e-05
        %v953 = vmax.f32 %v941, 1e-05
        %v954 = vmax.f32 %v942, 1e-05
        %v955 = vmax.f32 %v943, 1e-05
        %v956 = vmax.f32 %v944, 1e-05
        %v957 = vmax.f32 %v945, 1e-05
        %v958 = vmax.f32 %v946, 1e-05
        %v959 = vmax.f32 %v947, 1e-05
        %v960 = vmax.f32 %v948, 1e-05
        %v961 = vmax.f32 %v949, 1e-05
        %v962 = vlog2.pop %v950
        %v963 = vmul.f32 %v962, 0.6931472
        %v964 = vlog2.pop %v951
        %v965 = vmul.f32 %v964, 0.6931472
        %v966 = vlog2.pop %v952
        %v967 = vmul.f32 %v966, 0.6931472
        %v968 = vlog2.pop %v953
        %v969 = vmul.f32 %v968, 0.6931472
        %v970 = vlog2.pop %v954
        %v971 = vmul.f32 %v970, 0.6931472
        %v972 = vlog2.pop %v955
        %v973 = vmul.f32 %v972, 0.6931472
        %v974 = vlog2.pop %v956
        %v975 = vmul.f32 %v974, 0.6931472
        %v976 = vlog2.pop %v957
        %v977 = vmul.f32 %v976, 0.6931472
        %v978 = vlog2.pop %v958
        %v979 = vmul.f32 %v978, 0.6931472
        %v980 = vlog2.pop %v959
        %v981 = vmul.f32 %v980, 0.6931472
        %v982 = vlog2.pop %v960
        %v983 = vmul.f32 %v982, 0.6931472
        %v984 = vlog2.pop %v961
        %v985 = vmul.f32 %v984, 0.6931472
        %v986 = vsub.f32 1.0, %v938
        %v987 = vsub.f32 1.0, %v939
        %v988 = vsub.f32 1.0, %v940
        %v989 = vsub.f32 1.0, %v941
        %v990 = vsub.f32 1.0, %v942
        %v991 = vsub.f32 1.0, %v943
        %v992 = vsub.f32 1.0, %v944
        %v993 = vsub.f32 1.0, %v945
        %v994 = vsub.f32 1.0, %v946
        %v995 = vsub.f32 1.0, %v947
        %v996 = vsub.f32 1.0, %v948
        %v997 = vsub.f32 1.0, %v949
        %v998 = vmax.f32 %v986, 1e-05
        %v999 = vmax.f32 %v987, 1e-05
        %v1000 = vmax.f32 %v988, 1e-05
        %v1001 = vmax.f32 %v989, 1e-05
        %v1002 = vmax.f32 %v990, 1e-05
        %v1003 = vmax.f32 %v991, 1e-05
        %v1004 = vmax.f32 %v992, 1e-05
        %v1005 = vmax.f32 %v993, 1e-05
        %v1006 = vmax.f32 %v994, 1e-05
        %v1007 = vmax.f32 %v995, 1e-05
        %v1008 = vmax.f32 %v996, 1e-05
        %v1009 = vmax.f32 %v997, 1e-05
        %v1010 = vlog2.pop %v998
        %v1011 = vmul.f32 %v1010, 0.6931472
        %v1012 = vlog2.pop %v999
        %v1013 = vmul.f32 %v1012, 0.6931472
        %v1014 = vlog2.pop %v1000
        %v1015 = vmul.f32 %v1014, 0.6931472
        %v1016 = vlog2.pop %v1001
        %v1017 = vmul.f32 %v1016, 0.6931472
        %v1018 = vlog2.pop %v1002
        %v1019 = vmul.f32 %v1018, 0.6931472
        %v1020 = vlog2.pop %v1003
        %v1021 = vmul.f32 %v1020, 0.6931472
        %v1022 = vlog2.pop %v1004
        %v1023 = vmul.f32 %v1022, 0.6931472
        %v1024 = vlog2.pop %v1005
        %v1025 = vmul.f32 %v1024, 0.6931472
        %v1026 = vlog2.pop %v1006
        %v1027 = vmul.f32 %v1026, 0.6931472
        %v1028 = vlog2.pop %v1007
        %v1029 = vmul.f32 %v1028, 0.6931472
        %v1030 = vlog2.pop %v1008
        %v1031 = vmul.f32 %v1030, 0.6931472
        %v1032 = vlog2.pop %v1009
        %v1033 = vmul.f32 %v1032, 0.6931472
        %v1034 = vsub.f32 %v963, %v1011
        %v1035 = vsub.f32 %v965, %v1013
        %v1036 = vsub.f32 %v967, %v1015
        %v1037 = vsub.f32 %v969, %v1017
        %v1038 = vsub.f32 %v971, %v1019
        %v1039 = vsub.f32 %v973, %v1021
        %v1040 = vsub.f32 %v975, %v1023
        %v1041 = vsub.f32 %v977, %v1025
        %v1042 = vsub.f32 %v979, %v1027
        %v1043 = vsub.f32 %v981, %v1029
        %v1044 = vsub.f32 %v983, %v1031
        %v1045 = vsub.f32 %v985, %v1033
        %v1046 = vld [vmem:[%s9] sm:$0xf]
        %vm1047 = vcmask 31744
        %v1049 = vsel %vm1047, %v1034, 0
        %v1052 = vsel %vm1047, %v1035, 0
        %v1055 = vsel %vm1047, %v1036, 0
        %v1058 = vsel %vm1047, %v1037, 0
        %v1061 = vsel %vm1047, %v1038, 0
        %v1064 = vsel %vm1047, %v1039, 0
        %v1067 = vsel %vm1047, %v1040, 0
        %v1070 = vsel %vm1047, %v1041, 0
        %v1073 = vsel %vm1047, %v1042, 0
        %v1076 = vsel %vm1047, %v1043, 0
        %v1079 = vsel %vm1047, %v1044, 0
        %v1082 = vsel %vm1047, %v1045, 0
        %vm1084 = vcmask 1043456
        %v1086 = vsel %vm1084, %v1046, 0
        %1088 = vmatprep.subr.mxu0 0.0
        %1089 = vmatpush1.msra.mxu0 %v1086
        %1090 = vmatprep.subr.mxu0 0.0
        %1091 = vmatpush1.msra.mxu0 0.0
        %1092 = vmatprep.subr.mxu0 0.0
        %1093 = vmatpush1.msra.mxu0 0.0
        %1094 = vmatprep.subr.mxu0 0.0
        %1095 = vmatpush1.msra.mxu0 0.0
        %1096 = vmatprep.subr.mxu0 0.0
        %1097 = vmatpush1.msra.mxu0 0.0
        %1098 = vmatprep.subr.mxu0 0.0
        %1099 = vmatpush1.msra.mxu0 0.0
        %1100 = vmatprep.subr.mxu0 0.0
        %1101 = vmatpush1.msra.mxu0 0.0
        %1102 = vmatprep.subr.mxu0 0.0
        %1103 = vmatpush1.msra.mxu0 0.0
        %1104 = vmatprep.subr.mxu0 0.0
        %1105 = vmatpush1.msra.mxu0 0.0
        %1106 = vmatprep.subr.mxu0 0.0
        %1107 = vmatpush1.msra.mxu0 0.0
        %1108 = vmatprep.subr.mxu0 0.0
        %1109 = vmatpush1.msra.mxu0 0.0
        %1110 = vmatprep.subr.mxu0 0.0
        %1111 = vmatpush1.msra.mxu0 0.0
        %1112 = vmatprep.subr.mxu0 0.0
        %1113 = vmatpush1.msra.mxu0 0.0
        %1114 = vmatprep.subr.mxu0 0.0
        %1115 = vmatpush1.msra.mxu0 0.0
        %1116 = vmatprep.subr.mxu0 0.0
        %1117 = vmatpush1.msra.mxu0 0.0
        %1118 = vmatprep.subr.mxu0 0.0
        %1119 = vmatpush1.msra.mxu0 0.0
        %1120 = vmatprep.subr.mxu0 0.0
        %1121 = vmatpush1.msra.mxu0 0.0
        %1122 = vmatprep.subr.mxu0 0.0
        %1123 = vmatpush1.msra.mxu0 0.0
        %1124 = vmatprep.subr.mxu0 0.0
        %1125 = vmatpush1.msra.mxu0 0.0
        %1126 = vmatprep.subr.mxu0 0.0
        %1127 = vmatpush1.msra.mxu0 0.0
        %1128 = vmatprep.subr.mxu0 0.0
        %1129 = vmatpush1.msra.mxu0 0.0
        %1130 = vmatprep.subr.mxu0 0.0
        %1131 = vmatpush1.msra.mxu0 0.0
        %1132 = vmatprep.subr.mxu0 0.0
        %1133 = vmatpush1.msra.mxu0 0.0
        %1134 = vmatprep.subr.mxu0 0.0
        %1135 = vmatpush1.msra.mxu0 0.0
        %1136 = vmatprep.subr.mxu0 0.0
        %1137 = vmatpush1.msra.mxu0 0.0
        %1138 = vmatprep.subr.mxu0 0.0
        %1139 = vmatpush1.msra.mxu0 0.0
        %1140 = vmatprep.subr.mxu0 0.0
        %1141 = vmatpush1.msra.mxu0 0.0
        %1142 = vmatprep.subr.mxu0 0.0
        %1143 = vmatpush1.msra.mxu0 0.0
        %1144 = vmatprep.subr.mxu0 0.0
        %1145 = vmatpush1.msra.mxu0 0.0
        %1146 = vmatprep.subr.mxu0 0.0
        %1147 = vmatpush1.msra.mxu0 0.0
        %1148 = vmatprep.subr.mxu0 0.0
        %1149 = vmatpush1.msra.mxu0 0.0
        %1150 = vmatprep.subr.mxu0 0.0
        %1151 = vmatpush1.msra.mxu0 0.0
        %1152 = vmatprep.mubr.f32.mxu0 0.0
        %1153 = vmatmul.mubr.f32.gmra.mrb[0].mxu0 %v1049
        %v1154 = vpop.f32.mrb[0].mxu0
        %v1155 = vadd.f32 0.0, %v1154
        %v1156 = vpop.f32.mrb[0].mxu0
        %1157 = vmatprep.mubr.f32.mxu0 0.0
        %1158 = vmatmul.mubr.f32.gmra.mrb[0].mxu0 %v1052
        %v1159 = vpop.f32.mrb[0].mxu0
        %v1160 = vadd.f32 0.0, %v1159
        %v1161 = vpop.f32.mrb[0].mxu0
        %1162 = vmatprep.mubr.f32.mxu0 0.0
        %1163 = vmatmul.mubr.f32.gmra.mrb[0].mxu0 %v1055
        %v1164 = vpop.f32.mrb[0].mxu0
        %v1165 = vadd.f32 0.0, %v1164
        %v1166 = vpop.f32.mrb[0].mxu0
        %1167 = vmatprep.mubr.f32.mxu0 0.0
        %1168 = vmatmul.mubr.f32.gmra.mrb[0].mxu0 %v1058
        %v1169 = vpop.f32.mrb[0].mxu0
        %v1170 = vadd.f32 0.0, %v1169
        %v1171 = vpop.f32.mrb[0].mxu0
        %1172 = vmatprep.mubr.f32.mxu0 0.0
        %1173 = vmatmul.mubr.f32.gmra.mrb[0].mxu0 %v1061
        %v1174 = vpop.f32.mrb[0].mxu0
        %v1175 = vadd.f32 0.0, %v1174
        %v1176 = vpop.f32.mrb[0].mxu0
        %1177 = vmatprep.mubr.f32.mxu0 0.0
        %1178 = vmatmul.mubr.f32.gmra.mrb[0].mxu0 %v1064
        %v1179 = vpop.f32.mrb[0].mxu0
        %v1180 = vadd.f32 0.0, %v1179
        %v1181 = vpop.f32.mrb[0].mxu0
        %1182 = vmatprep.mubr.f32.mxu0 0.0
        %1183 = vmatmul.mubr.f32.gmra.mrb[0].mxu0 %v1067
        %v1184 = vpop.f32.mrb[0].mxu0
        %v1185 = vadd.f32 0.0, %v1184
        %v1186 = vpop.f32.mrb[0].mxu0
        %1187 = vmatprep.mubr.f32.mxu0 0.0
        %1188 = vmatmul.mubr.f32.gmra.mrb[0].mxu0 %v1070
        %v1189 = vpop.f32.mrb[0].mxu0
        %v1190 = vadd.f32 0.0, %v1189
        %v1191 = vpop.f32.mrb[0].mxu0
        %1192 = vmatprep.mubr.f32.mxu0 0.0
        %1193 = vmatmul.mubr.f32.gmra.mrb[0].mxu0 %v1073
        %v1194 = vpop.f32.mrb[0].mxu0
        %v1195 = vadd.f32 0.0, %v1194
        %v1196 = vpop.f32.mrb[0].mxu0
        %1197 = vmatprep.mubr.f32.mxu0 0.0
        %1198 = vmatmul.mubr.f32.gmra.mrb[0].mxu0 %v1076
        %v1199 = vpop.f32.mrb[0].mxu0
        %v1200 = vadd.f32 0.0, %v1199
        %v1201 = vpop.f32.mrb[0].mxu0
        %1202 = vmatprep.mubr.f32.mxu0 0.0
        %1203 = vmatmul.mubr.f32.gmra.mrb[0].mxu0 %v1079
        %v1204 = vpop.f32.mrb[0].mxu0
        %v1205 = vadd.f32 0.0, %v1204
        %v1206 = vpop.f32.mrb[0].mxu0
        %1207 = vmatprep.mubr.f32.mxu0 0.0
        %1208 = vmatmul.mubr.f32.gmra.mrb[0].mxu0 %v1082
        %v1209 = vpop.f32.mrb[0].mxu0
        %v1210 = vadd.f32 0.0, %v1209
        %v1211 = vpop.f32.mrb[0].mxu0
        %1212 = vdwg.mxu0
        %v1213 = vadd.f32 %v902, %v1155
        %v1214 = vadd.f32 %v903, %v1160
        %v1215 = vadd.f32 %v904, %v1165
        %v1216 = vadd.f32 %v905, %v1170
        %v1217 = vadd.f32 %v906, %v1175
        %v1218 = vadd.f32 %v907, %v1180
        %v1219 = vadd.f32 %v908, %v1185
        %v1220 = vadd.f32 %v909, %v1190
        %v1221 = vadd.f32 %v910, %v1195
        %v1222 = vadd.f32 %v911, %v1200
        %v1223 = vadd.f32 %v912, %v1205
        %v1224 = vadd.f32 %v913, %v1210
        %v1225 = vlaneseq
        %v1226 = vand.u32 %v1225, 127
        %v1227 = vsub.f32 0.0, %v1213
        %v1228 = vsub.f32 0.0, %v1214
        %v1229 = vsub.f32 0.0, %v1215
        %v1230 = vsub.f32 0.0, %v1216
        %v1231 = vsub.f32 0.0, %v1217
        %v1232 = vsub.f32 0.0, %v1218
        %v1233 = vsub.f32 0.0, %v1219
        %v1234 = vsub.f32 0.0, %v1220
        %v1235 = vsub.f32 0.0, %v1221
        %v1236 = vsub.f32 0.0, %v1222
        %v1237 = vsub.f32 0.0, %v1223
        %v1238 = vsub.f32 0.0, %v1224
        %v1239 = vmul.f32 %v1227, 1.442695
        %v1240 = vpow.pop %v1239
        %v1241 = vmul.f32 %v1228, 1.442695
        %v1242 = vpow.pop %v1241
        %v1243 = vmul.f32 %v1229, 1.442695
        %v1244 = vpow.pop %v1243
        %v1245 = vmul.f32 %v1230, 1.442695
        %v1246 = vpow.pop %v1245
        %v1247 = vmul.f32 %v1231, 1.442695
        %v1248 = vpow.pop %v1247
        %v1249 = vmul.f32 %v1232, 1.442695
        %v1250 = vpow.pop %v1249
        %v1251 = vmul.f32 %v1233, 1.442695
        %v1252 = vpow.pop %v1251
        %v1253 = vmul.f32 %v1234, 1.442695
        %v1254 = vpow.pop %v1253
        %v1255 = vmul.f32 %v1235, 1.442695
        %v1256 = vpow.pop %v1255
        %v1257 = vmul.f32 %v1236, 1.442695
        %v1258 = vpow.pop %v1257
        %v1259 = vmul.f32 %v1237, 1.442695
        %v1260 = vpow.pop %v1259
        %v1261 = vmul.f32 %v1238, 1.442695
        %v1262 = vpow.pop %v1261
        %v1263 = vadd.f32 %v1240, 1.0
        %v1264 = vadd.f32 %v1242, 1.0
        %v1265 = vadd.f32 %v1244, 1.0
        %v1266 = vadd.f32 %v1246, 1.0
        %v1267 = vadd.f32 %v1248, 1.0
        %v1268 = vadd.f32 %v1250, 1.0
        %v1269 = vadd.f32 %v1252, 1.0
        %v1270 = vadd.f32 %v1254, 1.0
        %v1271 = vadd.f32 %v1256, 1.0
        %v1272 = vadd.f32 %v1258, 1.0
        %v1273 = vadd.f32 %v1260, 1.0
        %v1274 = vadd.f32 %v1262, 1.0
        %v1275 = vrcp.pop %v1263
        %v1276 = vrcp.pop %v1264
        %v1277 = vrcp.pop %v1265
        %v1278 = vrcp.pop %v1266
        %v1279 = vrcp.pop %v1267
        %v1280 = vrcp.pop %v1268
        %v1281 = vrcp.pop %v1269
        %v1282 = vrcp.pop %v1270
        %v1283 = vrcp.pop %v1271
        %v1284 = vrcp.pop %v1272
        %v1285 = vrcp.pop %v1273
        %v1286 = vrcp.pop %v1274
        %vm1287 = vcmp.lt.s32.totalorder %v1226, 4
        %v1288 = vsel %vm1287, %v1275, %v1213
        %v1289 = vsel %vm1287, %v1276, %v1214
        %v1290 = vsel %vm1287, %v1277, %v1215
        %v1291 = vsel %vm1287, %v1278, %v1216
        %v1292 = vsel %vm1287, %v1279, %v1217
        %v1293 = vsel %vm1287, %v1280, %v1218
        %v1294 = vsel %vm1287, %v1281, %v1219
        %v1295 = vsel %vm1287, %v1282, %v1220
        %v1296 = vsel %vm1287, %v1283, %v1221
        %v1297 = vsel %vm1287, %v1284, %v1222
        %v1298 = vsel %vm1287, %v1285, %v1223
        %v1299 = vsel %vm1287, %v1286, %v1224
        %1300 = vst [vmem:[%s369] sm:$0xff] %v1288
        %1301 = vst [vmem:[%s369 + $0x8] sm:$0xff] %v1289
        %1302 = vst [vmem:[%s369 + $0x10] sm:$0xff] %v1290
        %1303 = vst [vmem:[%s369 + $0x18] sm:$0xff] %v1291
        %1304 = vst [vmem:[%s369 + $0x20] sm:$0xff] %v1292
        %1305 = vst [vmem:[%s369 + $0x28] sm:$0xff] %v1293
        %1306 = vst [vmem:[%s369 + $0x30] sm:$0xff] %v1294
        %1307 = vst [vmem:[%s369 + $0x38] sm:$0xff] %v1295
        %1308 = vst [vmem:[%s369 + $0x40] sm:$0xff] %v1296
        %1309 = vst [vmem:[%s369 + $0x48] sm:$0xff] %v1297
        %1310 = vst [vmem:[%s369 + $0x50] sm:$0xff] %v1298
        %1311 = vst [vmem:[%s369 + $0x58] sm:$0xff] %v1299
        %s1312 = sand.u32 %s252, 1
        %s1313 = scalar_lea.sflag [#allocation3], %s1312
        %s1314 = sand.u32 %s252, 1
        %s1315 = smul.addr %s1314, 96
        %s1316 = scalar_lea.vmem [#allocation2], %s1315
        // Predicated region
        $region61: #{tpu_custom_call.1} parent=59 // pred_check
          %p1317 = pneg %p262
        $region62: #{tpu_custom_call.1} parent=59 // pred_check_branch
          %1319 = sbr.rel (%p1317) target = $region64
        $region63: #{tpu_custom_call.1} parent=59 // pred_region
          %s1320 = smul.u32 12, %s24
          %s1322 = ssub.s32 1536, 1536
          %1323 = vsyncadd %s1313, %s1322
          %s1324 = smul.addr %s1320, 128
          %s1325 = scalar_lea.hbm %s10, %s1324
          %s1326 = sshll.u32 %s1316, 4
          %s1327 = int_to_ptr.vmem [resolvable:$true] %s1326
          %1332 = dma.vmem_to_hbm [thread:$0]  %s1327, 1536, %s1325, %s1313, 128, 128, 8
        $region64: #{tpu_custom_call.1} parent=59 // pred_fallthru
          _
      $region60: #{tpu_custom_call.1} parent=5 // pred_fallthru
        _
      %p1333 = scmp.le.s32.totalorder 2, %s19
      // Predicated region
      $region65: #{tpu_custom_call.1} parent=5 // pred_check
        %p1334 = pneg %p1333
      $region66: #{tpu_custom_call.1} parent=5 // pred_check_branch
        %1336 = sbr.rel (%p1334) target = $region68
      $region67: #{tpu_custom_call.1} parent=5 // pred_region
        %s1337 = ssub.s32 %s19, 2
        // Predicated region
        $region69: #{tpu_custom_call.1} parent=67 // pred_check
          %p1338 = pneg %p268
        $region70: #{tpu_custom_call.1} parent=67 // pred_check_branch
          %1340 = sbr.rel (%p1338) target = $region72
        $region71: #{tpu_custom_call.1} parent=67 // pred_region
          %s1341 = sand.u32 %s253, 1
          %s1342 = scalar_lea.sflag [#allocation3], %s1341
          %s1343 = sand.u32 %s253, 1
          %s1344 = smul.addr %s1343, 96
          %s1345 = scalar_lea.vmem [#allocation2], %s1344
          %1346 = dma.done %s1342, 1536
        $region72: #{tpu_custom_call.1} parent=67 // pred_fallthru
          _
      $region68: #{tpu_custom_call.1} parent=5 // pred_fallthru
        _
    $region6: #{tpu_custom_call.1} parent=1 // loop_footer
      %s23 = sadd.s32 1, %s19
    $region7: #{tpu_custom_call.1} parent=1 // loop_footer_branch
      %18 = sbr.rel target = $region3
    $region8: #{tpu_custom_call.1} parent=1 // loop_exit
      _
    %1347 = vsyncpa [#allocation3], 1
    %s1348 = scalar_lea.sflag [#allocation3], 1
    %1349 = vsyncpa %s1348, 1

</llo_original>
